<compile_context>
chip_gen: v6e
topology: v6e:2x2x1
jax: 0.10.0
libtpu: 0.0.40
codegen_flags: <defaults>
</compile_context>

<pallas_src>
import functools

import jax
import jax.numpy as jnp
from jax.experimental import pallas as pl
from jax.experimental.pallas import tpu as pltpu

INP_DIM = 784    # inp_dim / out_dim in the PyTorch module
Z_DIM = 32
Z_PAD = 128      # latent lane width (padded, 128-lane dense)
H_ENC1 = 256
H_ENC2 = 144
H_DEC1 = 144
H_DEC2 = 256
H_PAD = 256      # padded width for the 144-wide hidden dims


def vae_kernel(x_ref, eta_ref,
               we1_ref, be1_ref, we2_ref, be2_ref,
               wm_ref, bm_ref, wv_ref, bv_ref,
               wd1_ref, bd1_ref, wd2_ref, bd2_ref, wd3_ref, bd3_ref,
               out_ref, mean_ref, logvar_ref):
    f32 = jnp.float32
    bf16 = jnp.bfloat16

    x = x_ref[...]                                                  # bf16 (TB, 784)

    # ---- Encoder (bf16 MXU operands, f32 accumulation & elementwise) ----
    h = jnp.dot(x, we1_ref[...], preferred_element_type=f32) + be1_ref[...]
    h = jnp.maximum(h, 0.0)                                         # ReLU
    h = jnp.dot(h.astype(bf16), we2_ref[...], preferred_element_type=f32) + be2_ref[...]
    h = jnp.maximum(h, 0.0)                                         # (TB, 256); lanes 144: are 0

    hb = h.astype(bf16)
    # 128-lane-padded mean / log_variance heads (lanes 32: are exactly zero).
    mean_pad = jnp.dot(hb, wm_ref[...], preferred_element_type=f32) + bm_ref[...]
    logv_pad = jnp.dot(hb, wv_ref[...], preferred_element_type=f32) + bv_ref[...]
    mean_ref[...] = mean_pad
    logvar_ref[...] = logv_pad

    # ---- Reparameterize: z = mean + exp(log_var / 2) * eta  (lane-dense 128) ----
    # eta lanes 32: are zero, so padded lanes of z stay zero / finite.
    z = mean_pad + jnp.exp(logv_pad * 0.5) * eta_ref[...]           # (TB, 128)

    # ---- Decoder (wd1 zero-padded to (128, 256): K=128 unmasked pass) ----
    d = jnp.dot(z.astype(bf16), wd1_ref[...], preferred_element_type=f32) + bd1_ref[...]
    d = jnp.maximum(d, 0.0)
    d = jnp.dot(d.astype(bf16), wd2_ref[...], preferred_element_type=f32) + bd2_ref[...]
    d = jnp.maximum(d, 0.0)
    logits = jnp.dot(d.astype(bf16), wd3_ref[...], preferred_element_type=f32) + bd3_ref[...]

    # sigmoid(x) = 1 / (1 + exp(-x)) with EUP approximate reciprocal.
    sig = pl.reciprocal(1.0 + jnp.exp(-logits), approx=True)
    out_ref[...] = sig.astype(out_ref.dtype)                        # bf16 store


def init_linear(key, fan_in, fan_out):
    """Deterministic PyTorch-style Linear init; weight stored as (in, out)."""
    kw, kb = jax.random.split(key)
    bound = 1.0 / jnp.sqrt(jnp.asarray(fan_in, jnp.float32))
    w = jax.random.uniform(kw, (fan_in, fan_out), jnp.float32, -bound, bound)
    b = jax.random.uniform(kb, (1, fan_out), jnp.float32, -bound, bound)
    return w, b


def _pad2(a, rows, cols):
    return jnp.pad(a, ((0, rows - a.shape[0]), (0, cols - a.shape[1])))


def make_params(key):
    keys = jax.random.split(key, 7)
    we1, be1 = init_linear(keys[0], INP_DIM, H_ENC1)   # encoder.layer1
    we2, be2 = init_linear(keys[1], H_ENC1, H_ENC2)    # encoder.layer2
    wm,  bm  = init_linear(keys[2], H_ENC2, Z_DIM)     # encoder.mean
    wv,  bv  = init_linear(keys[3], H_ENC2, Z_DIM)     # encoder.log_variance
    wd1, bd1 = init_linear(keys[4], Z_DIM, H_DEC1)     # decoder.layer1
    wd2, bd2 = init_linear(keys[5], H_DEC1, H_DEC2)    # decoder.layer2
    wd3, bd3 = init_linear(keys[6], H_DEC2, INP_DIM)   # decoder.layer3

    # Zero-pad 144-wide hidden dims to 256 and the 32-wide latent to 128 lanes.
    we2_p = _pad2(we2, H_ENC1, H_PAD)        # (256, 256)
    be2_p = _pad2(be2, 1, H_PAD)
    wm_p  = _pad2(wm,  H_PAD, Z_PAD)         # (256, 128)
    bm_p  = _pad2(bm,  1, Z_PAD)
    wv_p  = _pad2(wv,  H_PAD, Z_PAD)
    bv_p  = _pad2(bv,  1, Z_PAD)
    wd1_p = _pad2(wd1, Z_PAD, H_PAD)         # (128, 256)
    bd1_p = _pad2(bd1, 1, H_PAD)
    wd2_p = _pad2(wd2, H_PAD, H_DEC2)        # (256, 256)

    bf = jnp.bfloat16   # bf16 weights (MXU operands); biases stay f32
    return (we1.astype(bf), be1,
            we2_p.astype(bf), be2_p,
            wm_p.astype(bf), bm_p,
            wv_p.astype(bf), bv_p,
            wd1_p.astype(bf), bd1_p,
            wd2_p.astype(bf), bd2,
            wd3.astype(bf), bd3)


def _round_up(n, m):
    return ((n + m - 1) // m) * m


@functools.partial(jax.jit, static_argnames=("block_b",))
def vae_forward(x, eta, params, block_b=1024):
    B = x.shape[0]

    # bf16 the wide input stream; zero-pad eta to 128 lanes (lane-dense latent path).
    x = x.astype(jnp.bfloat16)
    eta = jnp.pad(eta.astype(jnp.float32), ((0, 0), (0, Z_PAD - Z_DIM)))

    # Batch tile: multiple of 16 (bf16 sublane packing), capped at block_b, and
    # aimed at >= 2 grid steps so v7x's second TensorCore gets work.
    half = -(-B // 2)
    tb = min(block_b, max(16, _round_up(half, 16)))
    b_pad = _round_up(B, tb)
    if b_pad != B:
        x = jnp.pad(x, ((0, b_pad - B), (0, 0)))
        eta = jnp.pad(eta, ((0, b_pad - B), (0, 0)))

    grid = (b_pad // tb,)

    def batch_spec(d):
        return pl.BlockSpec((tb, d), lambda i: (i, 0))

    def resident_spec(shape):                       # weights/biases stay in VMEM
        return pl.BlockSpec(shape, lambda i: (0, 0))

    weight_bytes = sum(int(p.size) * p.dtype.itemsize for p in params)
    flops = 2 * b_pad * (INP_DIM * H_ENC1 + H_ENC1 * H_PAD + 2 * H_PAD * Z_PAD
                         + Z_PAD * H_PAD + H_PAD * H_DEC2 + H_DEC2 * INP_DIM)
    transcendentals = b_pad * (Z_PAD + 2 * INP_DIM)          # exp(z), exp+recip(out)
    bytes_accessed = (b_pad * (2 * INP_DIM * 2                # bf16 x + out
                               + 3 * Z_PAD * 4)               # eta + mean + logvar f32
                      + weight_bytes)

    out, mean_pad, logv_pad = pl.pallas_call(
        vae_kernel,
        out_shape=(
            jax.ShapeDtypeStruct((b_pad, INP_DIM), jnp.bfloat16),  # reconstruction
            jax.ShapeDtypeStruct((b_pad, Z_PAD), jnp.float32),     # padded mean
            jax.ShapeDtypeStruct((b_pad, Z_PAD), jnp.float32),     # padded log_var
        ),
        grid_spec=pltpu.PrefetchScalarGridSpec(
            num_scalar_prefetch=0,
            grid=grid,
            in_specs=[batch_spec(INP_DIM), batch_spec(Z_PAD)]
                     + [resident_spec(p.shape) for p in params],
            out_specs=(batch_spec(INP_DIM), batch_spec(Z_PAD), batch_spec(Z_PAD)),
        ),
        compiler_params=pltpu.CompilerParams(
            dimension_semantics=("parallel",),
            vmem_limit_bytes=48 * 1024 * 1024),
        cost_estimate=pl.CostEstimate(
            flops=flops,
            transcendentals=transcendentals,
            bytes_accessed=bytes_accessed),
    )(x, eta, *params)

    out = out[:B]
    mean = mean_pad[:B, :Z_DIM]
    log_var = logv_pad[:B, :Z_DIM]
    return out, mean, log_var


def vae_forward_ref(x, eta, params):
    """Pure-JAX reference mirroring the bf16-matmul / f32-elementwise recipe."""
    (we1, be1, we2, be2, wm, bm, wv, bv,
     wd1, bd1, wd2, bd2, wd3, bd3) = params
    bf16, f32 = jnp.bfloat16, jnp.float32
    xb = x.astype(bf16)
    h = jnp.maximum(jnp.dot(xb, we1, preferred_element_type=f32) + be1, 0.0)
    h = jnp.maximum(jnp.dot(h.astype(bf16), we2, preferred_element_type=f32) + be2, 0.0)
    mean_p = jnp.dot(h.astype(bf16), wm, preferred_element_type=f32) + bm
    logv_p = jnp.dot(h.astype(bf16), wv, preferred_element_type=f32) + bv
    eta_p = jnp.pad(eta.astype(f32), ((0, 0), (0, Z_PAD - Z_DIM)))
    z = mean_p + jnp.exp(logv_p * 0.5) * eta_p
    d = jnp.maximum(jnp.dot(z.astype(bf16), wd1, preferred_element_type=f32) + bd1, 0.0)
    d = jnp.maximum(jnp.dot(d.astype(bf16), wd2, preferred_element_type=f32) + bd2, 0.0)
    out = jax.nn.sigmoid(jnp.dot(d.astype(bf16), wd3, preferred_element_type=f32) + bd3)
    return out, mean_p[:, :Z_DIM], logv_p[:, :Z_DIM]


if __name__ == "__main__":
    key = jax.random.PRNGKey(0)
    k_x, k_eta, k_p = jax.random.split(key, 3)

    B = 8
    x = jax.random.uniform(k_x, (B, INP_DIM), jnp.float32)    # flattened images
    eta = jax.random.normal(k_eta, (B, Z_DIM), jnp.float32)   # reparam noise
    params = make_params(k_p)

    out, mean, log_var = vae_forward(x, eta, params)
    jax.block_until_ready((out, mean, log_var))

    # Correctness check against pure-JAX reference (bf16 matmul / bf16-out tolerance).
    out_r, mean_r, logvar_r = vae_forward_ref(x, eta, params)
    assert out.shape == (B, INP_DIM)
    assert mean.shape == (B, Z_DIM) and log_var.shape == (B, Z_DIM)
    assert jnp.allclose(out.astype(jnp.float32), out_r, atol=1e-2, rtol=1e-2)
    assert jnp.allclose(mean, mean_r, atol=1e-2, rtol=1e-2)
    assert jnp.allclose(log_var, logvar_r, atol=1e-2, rtol=1e-2)

    print("KERNEL_OK")
</pallas_src>

<mosaic_0001>
module attributes {stable_mosaic.version = 11 : i64} {
  func.func @vae_kernel(%arg0: i32, %arg1: memref<16x784xbf16, #tpu.memory_space<vmem>>, %arg2: memref<16x128xf32, #tpu.memory_space<vmem>>, %arg3: memref<784x256xbf16, #tpu.memory_space<vmem>>, %arg4: memref<1x256xf32, #tpu.memory_space<vmem>>, %arg5: memref<256x256xbf16, #tpu.memory_space<vmem>>, %arg6: memref<1x256xf32, #tpu.memory_space<vmem>>, %arg7: memref<256x128xbf16, #tpu.memory_space<vmem>>, %arg8: memref<1x128xf32, #tpu.memory_space<vmem>>, %arg9: memref<256x128xbf16, #tpu.memory_space<vmem>>, %arg10: memref<1x128xf32, #tpu.memory_space<vmem>>, %arg11: memref<128x256xbf16, #tpu.memory_space<vmem>>, %arg12: memref<1x256xf32, #tpu.memory_space<vmem>>, %arg13: memref<256x256xbf16, #tpu.memory_space<vmem>>, %arg14: memref<1x256xf32, #tpu.memory_space<vmem>>, %arg15: memref<256x784xbf16, #tpu.memory_space<vmem>>, %arg16: memref<1x784xf32, #tpu.memory_space<vmem>>, %arg17: memref<16x784xbf16, #tpu.memory_space<vmem>>, %arg18: memref<16x128xf32, #tpu.memory_space<vmem>>, %arg19: memref<16x128xf32, #tpu.memory_space<vmem>>) attributes {dimension_semantics = [#tpu.dimension_semantics<parallel>], iteration_bounds = array<i64: 1>, scalar_prefetch = 0 : i64, scratch_operands = 0 : i64, tpu.core_type = #tpu.core_type<tc>, window_params = [{transform_indices = @transform_0, window_bounds = array<i64: 16, 784>}, {transform_indices = @transform_1, window_bounds = array<i64: 16, 128>}, {pipeline_mode = #tpu.pipeline_mode<synchronous>, transform_indices = @transform_2, window_bounds = array<i64: 784, 256>}, {pipeline_mode = #tpu.pipeline_mode<synchronous>, transform_indices = @transform_3, window_bounds = array<i64: 1, 256>}, {pipeline_mode = #tpu.pipeline_mode<synchronous>, transform_indices = @transform_4, window_bounds = array<i64: 256, 256>}, {pipeline_mode = #tpu.pipeline_mode<synchronous>, transform_indices = @transform_5, window_bounds = array<i64: 1, 256>}, {pipeline_mode = #tpu.pipeline_mode<synchronous>, transform_indices = @transform_6, window_bounds = array<i64: 256, 128>}, {pipeline_mode = #tpu.pipeline_mode<synchronous>, transform_indices = @transform_7, window_bounds = array<i64: 1, 128>}, {pipeline_mode = #tpu.pipeline_mode<synchronous>, transform_indices = @transform_8, window_bounds = array<i64: 256, 128>}, {pipeline_mode = #tpu.pipeline_mode<synchronous>, transform_indices = @transform_9, window_bounds = array<i64: 1, 128>}, {pipeline_mode = #tpu.pipeline_mode<synchronous>, transform_indices = @transform_10, window_bounds = array<i64: 128, 256>}, {pipeline_mode = #tpu.pipeline_mode<synchronous>, transform_indices = @transform_11, window_bounds = array<i64: 1, 256>}, {pipeline_mode = #tpu.pipeline_mode<synchronous>, transform_indices = @transform_12, window_bounds = array<i64: 256, 256>}, {pipeline_mode = #tpu.pipeline_mode<synchronous>, transform_indices = @transform_13, window_bounds = array<i64: 1, 256>}, {pipeline_mode = #tpu.pipeline_mode<synchronous>, transform_indices = @transform_14, window_bounds = array<i64: 256, 784>}, {pipeline_mode = #tpu.pipeline_mode<synchronous>, transform_indices = @transform_15, window_bounds = array<i64: 1, 784>}, {transform_indices = @transform_16, window_bounds = array<i64: 16, 784>}, {transform_indices = @transform_17, window_bounds = array<i64: 16, 128>}, {transform_indices = @transform_18, window_bounds = array<i64: 16, 128>}]} {
    %c0 = arith.constant 0 : index
    %c0_0 = arith.constant 0 : index
    %0 = vector.load %arg1[%c0, %c0_0] : memref<16x784xbf16, #tpu.memory_space<vmem>>, vector<16x784xbf16>
    %c0_1 = arith.constant 0 : index
    %c0_2 = arith.constant 0 : index
    %1 = vector.load %arg3[%c0_1, %c0_2] : memref<784x256xbf16, #tpu.memory_space<vmem>>, vector<784x256xbf16>
    %cst = arith.constant dense<0.000000e+00> : vector<16x256xf32>
    %2 = tpu.matmul %0, %1, %cst {dimension_numbers = #tpu.dot_dimension_numbers<[1], [0], [0], [1], [0, 0, 1, 1], [], []>} : vector<16x784xbf16>, vector<784x256xbf16>, vector<16x256xf32> -> vector<16x256xf32>
    %c0_3 = arith.constant 0 : index
    %c0_4 = arith.constant 0 : index
    %3 = vector.load %arg4[%c0_3, %c0_4] : memref<1x256xf32, #tpu.memory_space<vmem>>, vector<1x256xf32>
    %4 = vector.broadcast %3 : vector<1x256xf32> to vector<16x256xf32>
    %5 = arith.addf %2, %4 : vector<16x256xf32>
    %cst_5 = arith.constant 0.000000e+00 : f32
    %6 = vector.broadcast %cst_5 : f32 to vector<16x256xf32>
    %7 = arith.maximumf %5, %6 : vector<16x256xf32>
    %8 = arith.truncf %7 : vector<16x256xf32> to vector<16x256xbf16>
    %c0_6 = arith.constant 0 : index
    %c0_7 = arith.constant 0 : index
    %9 = vector.load %arg5[%c0_6, %c0_7] : memref<256x256xbf16, #tpu.memory_space<vmem>>, vector<256x256xbf16>
    %cst_8 = arith.constant dense<0.000000e+00> : vector<16x256xf32>
    %10 = tpu.matmul %8, %9, %cst_8 {dimension_numbers = #tpu.dot_dimension_numbers<[1], [0], [0], [1], [0, 0, 1, 1], [], []>} : vector<16x256xbf16>, vector<256x256xbf16>, vector<16x256xf32> -> vector<16x256xf32>
    %c0_9 = arith.constant 0 : index
    %c0_10 = arith.constant 0 : index
    %11 = vector.load %arg6[%c0_9, %c0_10] : memref<1x256xf32, #tpu.memory_space<vmem>>, vector<1x256xf32>
    %12 = vector.broadcast %11 : vector<1x256xf32> to vector<16x256xf32>
    %13 = arith.addf %10, %12 : vector<16x256xf32>
    %cst_11 = arith.constant 0.000000e+00 : f32
    %14 = vector.broadcast %cst_11 : f32 to vector<16x256xf32>
    %15 = arith.maximumf %13, %14 : vector<16x256xf32>
    %16 = arith.truncf %15 : vector<16x256xf32> to vector<16x256xbf16>
    %c0_12 = arith.constant 0 : index
    %c0_13 = arith.constant 0 : index
    %17 = vector.load %arg7[%c0_12, %c0_13] : memref<256x128xbf16, #tpu.memory_space<vmem>>, vector<256x128xbf16>
    %cst_14 = arith.constant dense<0.000000e+00> : vector<16x128xf32>
    %18 = tpu.matmul %16, %17, %cst_14 {dimension_numbers = #tpu.dot_dimension_numbers<[1], [0], [0], [1], [0, 0, 1, 1], [], []>} : vector<16x256xbf16>, vector<256x128xbf16>, vector<16x128xf32> -> vector<16x128xf32>
    %c0_15 = arith.constant 0 : index
    %c0_16 = arith.constant 0 : index
    %19 = vector.load %arg8[%c0_15, %c0_16] : memref<1x128xf32, #tpu.memory_space<vmem>>, vector<1x128xf32>
    %20 = vector.broadcast %19 : vector<1x128xf32> to vector<16x128xf32>
    %21 = arith.addf %18, %20 : vector<16x128xf32>
    %c0_17 = arith.constant 0 : index
    %c0_18 = arith.constant 0 : index
    %22 = vector.load %arg9[%c0_17, %c0_18] : memref<256x128xbf16, #tpu.memory_space<vmem>>, vector<256x128xbf16>
    %cst_19 = arith.constant dense<0.000000e+00> : vector<16x128xf32>
    %23 = tpu.matmul %16, %22, %cst_19 {dimension_numbers = #tpu.dot_dimension_numbers<[1], [0], [0], [1], [0, 0, 1, 1], [], []>} : vector<16x256xbf16>, vector<256x128xbf16>, vector<16x128xf32> -> vector<16x128xf32>
    %c0_20 = arith.constant 0 : index
    %c0_21 = arith.constant 0 : index
    %24 = vector.load %arg10[%c0_20, %c0_21] : memref<1x128xf32, #tpu.memory_space<vmem>>, vector<1x128xf32>
    %25 = vector.broadcast %24 : vector<1x128xf32> to vector<16x128xf32>
    %26 = arith.addf %23, %25 : vector<16x128xf32>
    %c0_22 = arith.constant 0 : index
    %c0_23 = arith.constant 0 : index
    %27 = vector.load %arg18[%c0_22, %c0_23] : memref<16x128xf32, #tpu.memory_space<vmem>>, vector<16x128xf32>
    tpu.vector_store %arg18[%c0_22, %c0_23], %21 {strides = array<i32>} : memref<16x128xf32, #tpu.memory_space<vmem>>, vector<16x128xf32>,
    %c0_24 = arith.constant 0 : index
    %c0_25 = arith.constant 0 : index
    %28 = vector.load %arg19[%c0_24, %c0_25] : memref<16x128xf32, #tpu.memory_space<vmem>>, vector<16x128xf32>
    tpu.vector_store %arg19[%c0_24, %c0_25], %26 {strides = array<i32>} : memref<16x128xf32, #tpu.memory_space<vmem>>, vector<16x128xf32>,
    %cst_26 = arith.constant 5.000000e-01 : f32
    %29 = vector.broadcast %cst_26 : f32 to vector<16x128xf32>
    %30 = arith.mulf %26, %29 : vector<16x128xf32>
    %31 = math.exp %30 : vector<16x128xf32>
    %c0_27 = arith.constant 0 : index
    %c0_28 = arith.constant 0 : index
    %32 = vector.load %arg2[%c0_27, %c0_28] : memref<16x128xf32, #tpu.memory_space<vmem>>, vector<16x128xf32>
    %33 = arith.mulf %31, %32 : vector<16x128xf32>
    %34 = arith.addf %21, %33 : vector<16x128xf32>
    %35 = arith.truncf %34 : vector<16x128xf32> to vector<16x128xbf16>
    %c0_29 = arith.constant 0 : index
    %c0_30 = arith.constant 0 : index
    %36 = vector.load %arg11[%c0_29, %c0_30] : memref<128x256xbf16, #tpu.memory_space<vmem>>, vector<128x256xbf16>
    %cst_31 = arith.constant dense<0.000000e+00> : vector<16x256xf32>
    %37 = tpu.matmul %35, %36, %cst_31 {dimension_numbers = #tpu.dot_dimension_numbers<[1], [0], [0], [1], [0, 0, 1, 1], [], []>} : vector<16x128xbf16>, vector<128x256xbf16>, vector<16x256xf32> -> vector<16x256xf32>
    %c0_32 = arith.constant 0 : index
    %c0_33 = arith.constant 0 : index
    %38 = vector.load %arg12[%c0_32, %c0_33] : memref<1x256xf32, #tpu.memory_space<vmem>>, vector<1x256xf32>
    %39 = vector.broadcast %38 : vector<1x256xf32> to vector<16x256xf32>
    %40 = arith.addf %37, %39 : vector<16x256xf32>
    %cst_34 = arith.constant 0.000000e+00 : f32
    %41 = vector.broadcast %cst_34 : f32 to vector<16x256xf32>
    %42 = arith.maximumf %40, %41 : vector<16x256xf32>
    %43 = arith.truncf %42 : vector<16x256xf32> to vector<16x256xbf16>
    %c0_35 = arith.constant 0 : index
    %c0_36 = arith.constant 0 : index
    %44 = vector.load %arg13[%c0_35, %c0_36] : memref<256x256xbf16, #tpu.memory_space<vmem>>, vector<256x256xbf16>
    %cst_37 = arith.constant dense<0.000000e+00> : vector<16x256xf32>
    %45 = tpu.matmul %43, %44, %cst_37 {dimension_numbers = #tpu.dot_dimension_numbers<[1], [0], [0], [1], [0, 0, 1, 1], [], []>} : vector<16x256xbf16>, vector<256x256xbf16>, vector<16x256xf32> -> vector<16x256xf32>
    %c0_38 = arith.constant 0 : index
    %c0_39 = arith.constant 0 : index
    %46 = vector.load %arg14[%c0_38, %c0_39] : memref<1x256xf32, #tpu.memory_space<vmem>>, vector<1x256xf32>
    %47 = vector.broadcast %46 : vector<1x256xf32> to vector<16x256xf32>
    %48 = arith.addf %45, %47 : vector<16x256xf32>
    %cst_40 = arith.constant 0.000000e+00 : f32
    %49 = vector.broadcast %cst_40 : f32 to vector<16x256xf32>
    %50 = arith.maximumf %48, %49 : vector<16x256xf32>
    %51 = arith.truncf %50 : vector<16x256xf32> to vector<16x256xbf16>
    %c0_41 = arith.constant 0 : index
    %c0_42 = arith.constant 0 : index
    %52 = vector.load %arg15[%c0_41, %c0_42] : memref<256x784xbf16, #tpu.memory_space<vmem>>, vector<256x784xbf16>
    %cst_43 = arith.constant dense<0.000000e+00> : vector<16x784xf32>
    %53 = tpu.matmul %51, %52, %cst_43 {dimension_numbers = #tpu.dot_dimension_numbers<[1], [0], [0], [1], [0, 0, 1, 1], [], []>} : vector<16x256xbf16>, vector<256x784xbf16>, vector<16x784xf32> -> vector<16x784xf32>
    %c0_44 = arith.constant 0 : index
    %c0_45 = arith.constant 0 : index
    %54 = vector.load %arg16[%c0_44, %c0_45] : memref<1x784xf32, #tpu.memory_space<vmem>>, vector<1x784xf32>
    %55 = vector.broadcast %54 : vector<1x784xf32> to vector<16x784xf32>
    %56 = arith.addf %53, %55 : vector<16x784xf32>
    %cst_46 = arith.constant 0.000000e+00 : f32
    %57 = vector.broadcast %cst_46 : f32 to vector<16x784xf32>
    %58 = arith.subf %57, %56 : vector<16x784xf32>
    %59 = math.exp %58 : vector<16x784xf32>
    %cst_47 = arith.constant 1.000000e+00 : f32
    %60 = vector.broadcast %cst_47 : f32 to vector<16x784xf32>
    %61 = arith.addf %60, %59 : vector<16x784xf32>
    %62 = tpu.reciprocal %61 {approx = true} : vector<16x784xf32> -> vector<16x784xf32>
    %63 = arith.truncf %62 : vector<16x784xf32> to vector<16x784xbf16>
    %c0_48 = arith.constant 0 : index
    %c0_49 = arith.constant 0 : index
    %64 = vector.load %arg17[%c0_48, %c0_49] : memref<16x784xbf16, #tpu.memory_space<vmem>>, vector<16x784xbf16>
    tpu.vector_store %arg17[%c0_48, %c0_49], %63 {strides = array<i32>} : memref<16x784xbf16, #tpu.memory_space<vmem>>, vector<16x784xbf16>,
    return
  }
  func.func @transform_0(%arg0: i32) -> (i32, i32) {
    %c0_i32 = arith.constant 0 : i32
    %c0_i32_0 = arith.constant 0 : i32
    return %arg0, %c0_i32 : i32, i32
  }
  func.func @transform_1(%arg0: i32) -> (i32, i32) {
    %c0_i32 = arith.constant 0 : i32
    %c0_i32_0 = arith.constant 0 : i32
    return %arg0, %c0_i32 : i32, i32
  }
  func.func @transform_2(%arg0: i32) -> (i32, i32) {
    %c0_i32 = arith.constant 0 : i32
    %c0_i32_0 = arith.constant 0 : i32
    %c0_i32_1 = arith.constant 0 : i32
    return %c0_i32, %c0_i32_0 : i32, i32
  }
  func.func @transform_3(%arg0: i32) -> (i32, i32) {
    %c0_i32 = arith.constant 0 : i32
    %c0_i32_0 = arith.constant 0 : i32
    %c0_i32_1 = arith.constant 0 : i32
    return %c0_i32, %c0_i32_0 : i32, i32
  }
  func.func @transform_4(%arg0: i32) -> (i32, i32) {
    %c0_i32 = arith.constant 0 : i32
    %c0_i32_0 = arith.constant 0 : i32
    %c0_i32_1 = arith.constant 0 : i32
    return %c0_i32, %c0_i32_0 : i32, i32
  }
  func.func @transform_5(%arg0: i32) -> (i32, i32) {
    %c0_i32 = arith.constant 0 : i32
    %c0_i32_0 = arith.constant 0 : i32
    %c0_i32_1 = arith.constant 0 : i32
    return %c0_i32, %c0_i32_0 : i32, i32
  }
  func.func @transform_6(%arg0: i32) -> (i32, i32) {
    %c0_i32 = arith.constant 0 : i32
    %c0_i32_0 = arith.constant 0 : i32
    %c0_i32_1 = arith.constant 0 : i32
    return %c0_i32, %c0_i32_0 : i32, i32
  }
  func.func @transform_7(%arg0: i32) -> (i32, i32) {
    %c0_i32 = arith.constant 0 : i32
    %c0_i32_0 = arith.constant 0 : i32
    %c0_i32_1 = arith.constant 0 : i32
    return %c0_i32, %c0_i32_0 : i32, i32
  }
  func.func @transform_8(%arg0: i32) -> (i32, i32) {
    %c0_i32 = arith.constant 0 : i32
    %c0_i32_0 = arith.constant 0 : i32
    %c0_i32_1 = arith.constant 0 : i32
    return %c0_i32, %c0_i32_0 : i32, i32
  }
  func.func @transform_9(%arg0: i32) -> (i32, i32) {
    %c0_i32 = arith.constant 0 : i32
    %c0_i32_0 = arith.constant 0 : i32
    %c0_i32_1 = arith.constant 0 : i32
    return %c0_i32, %c0_i32_0 : i32, i32
  }
  func.func @transform_10(%arg0: i32) -> (i32, i32) {
    %c0_i32 = arith.constant 0 : i32
    %c0_i32_0 = arith.constant 0 : i32
    %c0_i32_1 = arith.constant 0 : i32
    return %c0_i32, %c0_i32_0 : i32, i32
  }
  func.func @transform_11(%arg0: i32) -> (i32, i32) {
    %c0_i32 = arith.constant 0 : i32
    %c0_i32_0 = arith.constant 0 : i32
    %c0_i32_1 = arith.constant 0 : i32
    return %c0_i32, %c0_i32_0 : i32, i32
  }
  func.func @transform_12(%arg0: i32) -> (i32, i32) {
    %c0_i32 = arith.constant 0 : i32
    %c0_i32_0 = arith.constant 0 : i32
    %c0_i32_1 = arith.constant 0 : i32
    return %c0_i32, %c0_i32_0 : i32, i32
  }
  func.func @transform_13(%arg0: i32) -> (i32, i32) {
    %c0_i32 = arith.constant 0 : i32
    %c0_i32_0 = arith.constant 0 : i32
    %c0_i32_1 = arith.constant 0 : i32
    return %c0_i32, %c0_i32_0 : i32, i32
  }
  func.func @transform_14(%arg0: i32) -> (i32, i32) {
    %c0_i32 = arith.constant 0 : i32
    %c0_i32_0 = arith.constant 0 : i32
    %c0_i32_1 = arith.constant 0 : i32
    return %c0_i32, %c0_i32_0 : i32, i32
  }
  func.func @transform_15(%arg0: i32) -> (i32, i32) {
    %c0_i32 = arith.constant 0 : i32
    %c0_i32_0 = arith.constant 0 : i32
    %c0_i32_1 = arith.constant 0 : i32
    return %c0_i32, %c0_i32_0 : i32, i32
  }
  func.func @transform_16(%arg0: i32) -> (i32, i32) {
    %c0_i32 = arith.constant 0 : i32
    %c0_i32_0 = arith.constant 0 : i32
    return %arg0, %c0_i32 : i32, i32
  }
  func.func @transform_17(%arg0: i32) -> (i32, i32) {
    %c0_i32 = arith.constant 0 : i32
    %c0_i32_0 = arith.constant 0 : i32
    return %arg0, %c0_i32 : i32, i32
  }
  func.func @transform_18(%arg0: i32) -> (i32, i32) {
    %c0_i32 = arith.constant 0 : i32
    %c0_i32_0 = arith.constant 0 : i32
    return %arg0, %c0_i32 : i32, i32
  }
}

</mosaic_0001>

<llo_original>
// kernel: vae_forward.1
$region0: #{vae_forward.1}
  #allocation0 [shape = 'u32[]', space=smem, size = 0x4, offset = 0x4, fixed_abs, tag = 'smem constant byte address 0x4 - core index']
  #allocation1 [shape = 'u32[144,128]{1,0:T(1,128)}', space=vmem, size = 0x12000, scoped, tag = 'internal scratch']
  %s0 = inlined_call_operand.vmem [shape: bf16[16,784], index: 0, kind: input, shape index: {}]
  %s1 = inlined_call_operand.vmem [shape: f32[16,128], index: 1, kind: input, shape index: {}]
  %s2 = inlined_call_operand.vmem [shape: bf16[784,256], index: 2, kind: input, shape index: {}]
  %s3 = inlined_call_operand.vmem [shape: f32[1,256], index: 3, kind: input, shape index: {}]
  %s4 = inlined_call_operand.vmem [shape: bf16[256,256], index: 4, kind: input, shape index: {}]
  %s5 = inlined_call_operand.vmem [shape: f32[1,256], index: 5, kind: input, shape index: {}]
  %s6 = inlined_call_operand.vmem [shape: bf16[256,128], index: 6, kind: input, shape index: {}]
  %s7 = inlined_call_operand.vmem [shape: f32[1,128], index: 7, kind: input, shape index: {}]
  %s8 = inlined_call_operand.vmem [shape: bf16[256,128], index: 8, kind: input, shape index: {}]
  %s9 = inlined_call_operand.vmem [shape: f32[1,128], index: 9, kind: input, shape index: {}]
  %s10 = inlined_call_operand.vmem [shape: bf16[128,256], index: 10, kind: input, shape index: {}]
  %s11 = inlined_call_operand.vmem [shape: f32[1,256], index: 11, kind: input, shape index: {}]
  %s12 = inlined_call_operand.vmem [shape: bf16[256,256], index: 12, kind: input, shape index: {}]
  %s13 = inlined_call_operand.vmem [shape: f32[1,256], index: 13, kind: input, shape index: {}]
  %s14 = inlined_call_operand.vmem [shape: bf16[256,784], index: 14, kind: input, shape index: {}]
  %s15 = inlined_call_operand.vmem [shape: f32[1,784], index: 15, kind: input, shape index: {}]
  %s16 = inlined_call_operand.vmem [shape: bf16[16,784], index: 16, kind: output, shape index: {0}]
  %s17 = inlined_call_operand.vmem [shape: f32[16,128], index: 17, kind: output, shape index: {1}]
  %s18 = inlined_call_operand.vmem [shape: f32[16,128], index: 18, kind: output, shape index: {2}]
  %19 = xla_tuple %s16, %s17, %s18
  %s20 = sld [smem:[#allocation0]]
  $region90: #{vae_forward.1} parent=0
    _
  %s22 = ssub.s32 1, %s20
  %s23 = scalar_select 0, %s22, %s20
  // Predicated region
  $region2: #{vae_forward.1} parent=0 // pred_check
    _
  $region3: #{vae_forward.1} parent=0 // pred_check_branch
    %25 = sbr.rel (0) target = $region5
  $region4: #{vae_forward.1} parent=0 // pred_region
    _
  $region5: #{vae_forward.1} parent=0 // pred_fallthru
    _
  // Predicated region
  $region6: #{vae_forward.1} parent=0 // pred_check
    _
  $region7: #{vae_forward.1} parent=0 // pred_check_branch
    %27 = sbr.rel (0) target = $region9
  $region8: #{vae_forward.1} parent=0 // pred_region
    _
  $region9: #{vae_forward.1} parent=0 // pred_fallthru
    _
  // Predicated region
  $region10: #{vae_forward.1} parent=0 // pred_check
    _
  $region11: #{vae_forward.1} parent=0 // pred_check_branch
    %29 = sbr.rel (0) target = $region13
  $region12: #{vae_forward.1} parent=0 // pred_region
    _
  $region13: #{vae_forward.1} parent=0 // pred_fallthru
    _
  // Predicated region
  $region14: #{vae_forward.1} parent=0 // pred_check
    _
  $region15: #{vae_forward.1} parent=0 // pred_check_branch
    %31 = sbr.rel (0) target = $region17
  $region16: #{vae_forward.1} parent=0 // pred_region
    _
  $region17: #{vae_forward.1} parent=0 // pred_fallthru
    _
  // Predicated region
  $region18: #{vae_forward.1} parent=0 // pred_check
    _
  $region19: #{vae_forward.1} parent=0 // pred_check_branch
    %33 = sbr.rel (0) target = $region21
  $region20: #{vae_forward.1} parent=0 // pred_region
    _
  $region21: #{vae_forward.1} parent=0 // pred_fallthru
    _
  // Predicated region
  $region22: #{vae_forward.1} parent=0 // pred_check
    _
  $region23: #{vae_forward.1} parent=0 // pred_check_branch
    %35 = sbr.rel (0) target = $region25
  $region24: #{vae_forward.1} parent=0 // pred_region
    _
  $region25: #{vae_forward.1} parent=0 // pred_fallthru
    _
  // Predicated region
  $region26: #{vae_forward.1} parent=0 // pred_check
    _
  $region27: #{vae_forward.1} parent=0 // pred_check_branch
    %37 = sbr.rel (0) target = $region29
  $region28: #{vae_forward.1} parent=0 // pred_region
    _
  $region29: #{vae_forward.1} parent=0 // pred_fallthru
    _
  // Predicated region
  $region30: #{vae_forward.1} parent=0 // pred_check
    _
  $region31: #{vae_forward.1} parent=0 // pred_check_branch
    %39 = sbr.rel (0) target = $region33
  $region32: #{vae_forward.1} parent=0 // pred_region
    _
  $region33: #{vae_forward.1} parent=0 // pred_fallthru
    _
  // Predicated region
  $region34: #{vae_forward.1} parent=0 // pred_check
    _
  $region35: #{vae_forward.1} parent=0 // pred_check_branch
    %41 = sbr.rel (0) target = $region37
  $region36: #{vae_forward.1} parent=0 // pred_region
    _
  $region37: #{vae_forward.1} parent=0 // pred_fallthru
    _
  // Predicated region
  $region38: #{vae_forward.1} parent=0 // pred_check
    _
  $region39: #{vae_forward.1} parent=0 // pred_check_branch
    %43 = sbr.rel (0) target = $region41
  $region40: #{vae_forward.1} parent=0 // pred_region
    _
  $region41: #{vae_forward.1} parent=0 // pred_fallthru
    _
  // Predicated region
  $region42: #{vae_forward.1} parent=0 // pred_check
    _
  $region43: #{vae_forward.1} parent=0 // pred_check_branch
    %45 = sbr.rel (0) target = $region45
  $region44: #{vae_forward.1} parent=0 // pred_region
    _
  $region45: #{vae_forward.1} parent=0 // pred_fallthru
    _
  // Predicated region
  $region46: #{vae_forward.1} parent=0 // pred_check
    _
  $region47: #{vae_forward.1} parent=0 // pred_check_branch
    %47 = sbr.rel (0) target = $region49
  $region48: #{vae_forward.1} parent=0 // pred_region
    _
  $region49: #{vae_forward.1} parent=0 // pred_fallthru
    _
  // Predicated region
  $region50: #{vae_forward.1} parent=0 // pred_check
    _
  $region51: #{vae_forward.1} parent=0 // pred_check_branch
    %49 = sbr.rel (0) target = $region53
  $region52: #{vae_forward.1} parent=0 // pred_region
    _
  $region53: #{vae_forward.1} parent=0 // pred_fallthru
    _
  // Predicated region
  $region54: #{vae_forward.1} parent=0 // pred_check
    _
  $region55: #{vae_forward.1} parent=0 // pred_check_branch
    %51 = sbr.rel (0) target = $region57
  $region56: #{vae_forward.1} parent=0 // pred_region
    _
  $region57: #{vae_forward.1} parent=0 // pred_fallthru
    _
  // Predicated region
  $region58: #{vae_forward.1} parent=0 // pred_check
    _
  $region59: #{vae_forward.1} parent=0 // pred_check_branch
    %53 = sbr.rel (0) target = $region61
  $region60: #{vae_forward.1} parent=0 // pred_region
    _
  $region61: #{vae_forward.1} parent=0 // pred_fallthru
    _
  // Predicated region
  $region62: #{vae_forward.1} parent=0 // pred_check
    _
  $region63: #{vae_forward.1} parent=0 // pred_check_branch
    %55 = sbr.rel (0) target = $region65
  $region64: #{vae_forward.1} parent=0 // pred_region
    _
  $region65: #{vae_forward.1} parent=0 // pred_fallthru
    _
  %v57 = vld [vmem:[%s0] sm:$0xff]
  %v58 = vld [vmem:[%s0 + $0x8] sm:$0xff]
  %v59 = vld [vmem:[%s0 + $0x10] sm:$0xff]
  %v60 = vld [vmem:[%s0 + $0x18] sm:$0xf]
  %v61 = vld [vmem:[%s0 + $0x1c] sm:$0xff]
  %v62 = vld [vmem:[%s0 + $0x24] sm:$0xff]
  %v63 = vld [vmem:[%s0 + $0x2c] sm:$0xff]
  %v64 = vld [vmem:[%s0 + $0x34] sm:$0xf]
  %v65 = vld [vmem:[%s2] sm:$0xff]
  %v66 = vld [vmem:[%s2 + $0x8] sm:$0xff]
  %v67 = vld [vmem:[%s2 + $0x10] sm:$0xff]
  %v68 = vld [vmem:[%s2 + $0x18] sm:$0xff]
  %v69 = vld [vmem:[%s2 + $0x20] sm:$0xff]
  %v70 = vld [vmem:[%s2 + $0x28] sm:$0xff]
  %v71 = vld [vmem:[%s2 + $0x30] sm:$0xff]
  %v72 = vld [vmem:[%s2 + $0x38] sm:$0xff]
  %v73 = vld [vmem:[%s2 + $0x40] sm:$0xff]
  %v74 = vld [vmem:[%s2 + $0x48] sm:$0xff]
  %v75 = vld [vmem:[%s2 + $0x50] sm:$0xff]
  %v76 = vld [vmem:[%s2 + $0x58] sm:$0xff]
  %v77 = vld [vmem:[%s2 + $0x60] sm:$0xff]
  %v78 = vld [vmem:[%s2 + $0x68] sm:$0xff]
  %v79 = vld [vmem:[%s2 + $0x70] sm:$0xff]
  %v80 = vld [vmem:[%s2 + $0x78] sm:$0xff]
  %v81 = vld [vmem:[%s2 + $0x80] sm:$0xff]
  %v82 = vld [vmem:[%s2 + $0x88] sm:$0xff]
  %v83 = vld [vmem:[%s2 + $0x90] sm:$0xff]
  %v84 = vld [vmem:[%s2 + $0x98] sm:$0xff]
  %v85 = vld [vmem:[%s2 + $0xa0] sm:$0xff]
  %v86 = vld [vmem:[%s2 + $0xa8] sm:$0xff]
  %v87 = vld [vmem:[%s2 + $0xb0] sm:$0xff]
  %v88 = vld [vmem:[%s2 + $0xb8] sm:$0xff]
  %v89 = vld [vmem:[%s2 + $0xc0] sm:$0xff]
  %v90 = vld [vmem:[%s2 + $0xc8] sm:$0xff]
  %v91 = vld [vmem:[%s2 + $0xd0] sm:$0xff]
  %v92 = vld [vmem:[%s2 + $0xd8] sm:$0xff]
  %v93 = vld [vmem:[%s2 + $0xe0] sm:$0xff]
  %v94 = vld [vmem:[%s2 + $0xe8] sm:$0xff]
  %v95 = vld [vmem:[%s2 + $0xf0] sm:$0xff]
  %v96 = vld [vmem:[%s2 + $0xf8] sm:$0xff]
  %v97 = vld [vmem:[%s2 + $0x100] sm:$0xff]
  %v98 = vld [vmem:[%s2 + $0x108] sm:$0xff]
  %v99 = vld [vmem:[%s2 + $0x110] sm:$0xff]
  %v100 = vld [vmem:[%s2 + $0x118] sm:$0xff]
  %v101 = vld [vmem:[%s2 + $0x120] sm:$0xff]
  %v102 = vld [vmem:[%s2 + $0x128] sm:$0xff]
  %v103 = vld [vmem:[%s2 + $0x130] sm:$0xff]
  %v104 = vld [vmem:[%s2 + $0x138] sm:$0xff]
  %v105 = vld [vmem:[%s2 + $0x140] sm:$0xff]
  %v106 = vld [vmem:[%s2 + $0x148] sm:$0xff]
  %v107 = vld [vmem:[%s2 + $0x150] sm:$0xff]
  %v108 = vld [vmem:[%s2 + $0x158] sm:$0xff]
  %v109 = vld [vmem:[%s2 + $0x160] sm:$0xff]
  %v110 = vld [vmem:[%s2 + $0x168] sm:$0xff]
  %v111 = vld [vmem:[%s2 + $0x170] sm:$0xff]
  %v112 = vld [vmem:[%s2 + $0x178] sm:$0xff]
  %v113 = vld [vmem:[%s2 + $0x180] sm:$0xff]
  %v114 = vld [vmem:[%s2 + $0x188] sm:$0xff]
  %v115 = vld [vmem:[%s2 + $0x190] sm:$0xff]
  %v116 = vld [vmem:[%s2 + $0x198] sm:$0xff]
  %v117 = vld [vmem:[%s2 + $0x1a0] sm:$0xff]
  %v118 = vld [vmem:[%s2 + $0x1a8] sm:$0xff]
  %v119 = vld [vmem:[%s2 + $0x1b0] sm:$0xff]
  %v120 = vld [vmem:[%s2 + $0x1b8] sm:$0xff]
  %v121 = vld [vmem:[%s2 + $0x1c0] sm:$0xff]
  %v122 = vld [vmem:[%s2 + $0x1c8] sm:$0xff]
  %v123 = vld [vmem:[%s2 + $0x1d0] sm:$0xff]
  %v124 = vld [vmem:[%s2 + $0x1d8] sm:$0xff]
  %v125 = vld [vmem:[%s2 + $0x1e0] sm:$0xff]
  %v126 = vld [vmem:[%s2 + $0x1e8] sm:$0xff]
  %v127 = vld [vmem:[%s2 + $0x1f0] sm:$0xff]
  %v128 = vld [vmem:[%s2 + $0x1f8] sm:$0xff]
  %v129 = vld [vmem:[%s2 + $0x200] sm:$0xff]
  %v130 = vld [vmem:[%s2 + $0x208] sm:$0xff]
  %v131 = vld [vmem:[%s2 + $0x210] sm:$0xff]
  %v132 = vld [vmem:[%s2 + $0x218] sm:$0xff]
  %v133 = vld [vmem:[%s2 + $0x220] sm:$0xff]
  %v134 = vld [vmem:[%s2 + $0x228] sm:$0xff]
  %v135 = vld [vmem:[%s2 + $0x230] sm:$0xff]
  %v136 = vld [vmem:[%s2 + $0x238] sm:$0xff]
  %v137 = vld [vmem:[%s2 + $0x240] sm:$0xff]
  %v138 = vld [vmem:[%s2 + $0x248] sm:$0xff]
  %v139 = vld [vmem:[%s2 + $0x250] sm:$0xff]
  %v140 = vld [vmem:[%s2 + $0x258] sm:$0xff]
  %v141 = vld [vmem:[%s2 + $0x260] sm:$0xff]
  %v142 = vld [vmem:[%s2 + $0x268] sm:$0xff]
  %v143 = vld [vmem:[%s2 + $0x270] sm:$0xff]
  %v144 = vld [vmem:[%s2 + $0x278] sm:$0xff]
  %v145 = vld [vmem:[%s2 + $0x280] sm:$0xff]
  %v146 = vld [vmem:[%s2 + $0x288] sm:$0xff]
  %v147 = vld [vmem:[%s2 + $0x290] sm:$0xff]
  %v148 = vld [vmem:[%s2 + $0x298] sm:$0xff]
  %v149 = vld [vmem:[%s2 + $0x2a0] sm:$0xff]
  %v150 = vld [vmem:[%s2 + $0x2a8] sm:$0xff]
  %v151 = vld [vmem:[%s2 + $0x2b0] sm:$0xff]
  %v152 = vld [vmem:[%s2 + $0x2b8] sm:$0xff]
  %v153 = vld [vmem:[%s2 + $0x2c0] sm:$0xff]
  %v154 = vld [vmem:[%s2 + $0x2c8] sm:$0xff]
  %v155 = vld [vmem:[%s2 + $0x2d0] sm:$0xff]
  %v156 = vld [vmem:[%s2 + $0x2d8] sm:$0xff]
  %v157 = vld [vmem:[%s2 + $0x2e0] sm:$0xff]
  %v158 = vld [vmem:[%s2 + $0x2e8] sm:$0xff]
  %v159 = vld [vmem:[%s2 + $0x2f0] sm:$0xff]
  %v160 = vld [vmem:[%s2 + $0x2f8] sm:$0xff]
  %v161 = vld [vmem:[%s2 + $0x300] sm:$0xff]
  %v162 = vld [vmem:[%s2 + $0x308] sm:$0xff]
  %v163 = vld [vmem:[%s3] sm:$0x3]
  %v165 = vlaneseq
  %v166 = vshrl.u32 %v165, 7
  %v167 = vsub.s32 0, %v166
  %v168 = vrot.slane %v163, %v167
  %v169 = vlaneseq
  %v170 = vshrl.u32 %v169, 7
  %v171 = vsub.s32 1, %v170
  %v172 = vrot.slane %v163, %v171
  %v183 = vunpack.c.l.b16 %v57
  %v184 = vunpack.c.h.b16 %v57
  %v185 = vunpack.c.l.b16 %v58
  %v186 = vunpack.c.h.b16 %v58
  %v187 = vunpack.c.l.b16 %v59
  %v188 = vunpack.c.h.b16 %v59
  %v189 = vunpack.c.l.b16 %v60
  %v190 = vunpack.c.l.b16 %v61
  %v191 = vunpack.c.h.b16 %v61
  %v192 = vunpack.c.l.b16 %v62
  %v193 = vunpack.c.h.b16 %v62
  %v194 = vunpack.c.l.b16 %v63
  %v195 = vunpack.c.h.b16 %v63
  %v196 = vunpack.c.l.b16 %v64
  %v197 = vpack.c.b16 %v190, %v183
  %v198 = vpack.c.b16 %v191, %v184
  %v199 = vpack.c.b16 %v192, %v185
  %v200 = vpack.c.b16 %v193, %v186
  %v201 = vpack.c.b16 %v194, %v187
  %v202 = vpack.c.b16 %v195, %v188
  %v203 = vpack.c.b16 %v196, %v189
  %v308 = vunpack.c.l.b16 %v65
  %v309 = vunpack.c.h.b16 %v65
  %v310 = vunpack.c.l.b16 %v66
  %v311 = vunpack.c.h.b16 %v66
  %v312 = vunpack.c.l.b16 %v67
  %v313 = vunpack.c.h.b16 %v67
  %v314 = vunpack.c.l.b16 %v68
  %v315 = vunpack.c.h.b16 %v68
  %v316 = vunpack.c.l.b16 %v69
  %v317 = vunpack.c.h.b16 %v69
  %v318 = vunpack.c.l.b16 %v70
  %v319 = vunpack.c.h.b16 %v70
  %v320 = vunpack.c.l.b16 %v71
  %v321 = vunpack.c.h.b16 %v71
  %v322 = vunpack.c.l.b16 %v72
  %v323 = vunpack.c.h.b16 %v72
  %v324 = vunpack.c.l.b16 %v73
  %v325 = vunpack.c.h.b16 %v73
  %v326 = vunpack.c.l.b16 %v74
  %v327 = vunpack.c.h.b16 %v74
  %v328 = vunpack.c.l.b16 %v75
  %v329 = vunpack.c.h.b16 %v75
  %v330 = vunpack.c.l.b16 %v76
  %v331 = vunpack.c.h.b16 %v76
  %v332 = vunpack.c.l.b16 %v77
  %v333 = vunpack.c.h.b16 %v77
  %v334 = vunpack.c.l.b16 %v78
  %v335 = vunpack.c.h.b16 %v78
  %v336 = vunpack.c.l.b16 %v79
  %v337 = vunpack.c.h.b16 %v79
  %v338 = vunpack.c.l.b16 %v80
  %v339 = vunpack.c.h.b16 %v80
  %v340 = vunpack.c.l.b16 %v81
  %v341 = vunpack.c.h.b16 %v81
  %v342 = vunpack.c.l.b16 %v82
  %v343 = vunpack.c.h.b16 %v82
  %v344 = vunpack.c.l.b16 %v83
  %v345 = vunpack.c.h.b16 %v83
  %v346 = vunpack.c.l.b16 %v84
  %v347 = vunpack.c.h.b16 %v84
  %v348 = vunpack.c.l.b16 %v85
  %v349 = vunpack.c.h.b16 %v85
  %v350 = vunpack.c.l.b16 %v86
  %v351 = vunpack.c.h.b16 %v86
  %v352 = vunpack.c.l.b16 %v87
  %v353 = vunpack.c.h.b16 %v87
  %v354 = vunpack.c.l.b16 %v88
  %v355 = vunpack.c.h.b16 %v88
  %v356 = vunpack.c.l.b16 %v89
  %v357 = vunpack.c.h.b16 %v89
  %v358 = vunpack.c.l.b16 %v90
  %v359 = vunpack.c.h.b16 %v90
  %v360 = vunpack.c.l.b16 %v91
  %v361 = vunpack.c.h.b16 %v91
  %v362 = vunpack.c.l.b16 %v92
  %v363 = vunpack.c.h.b16 %v92
  %v364 = vunpack.c.l.b16 %v93
  %v365 = vunpack.c.h.b16 %v93
  %v366 = vunpack.c.l.b16 %v94
  %v367 = vunpack.c.h.b16 %v94
  %v368 = vunpack.c.l.b16 %v95
  %v369 = vunpack.c.h.b16 %v95
  %v370 = vunpack.c.l.b16 %v96
  %v371 = vunpack.c.h.b16 %v96
  %v372 = vunpack.c.l.b16 %v97
  %v373 = vunpack.c.h.b16 %v97
  %v374 = vunpack.c.l.b16 %v98
  %v375 = vunpack.c.h.b16 %v98
  %v376 = vunpack.c.l.b16 %v99
  %v377 = vunpack.c.h.b16 %v99
  %v378 = vunpack.c.l.b16 %v100
  %v379 = vunpack.c.h.b16 %v100
  %v380 = vunpack.c.l.b16 %v101
  %v381 = vunpack.c.h.b16 %v101
  %v382 = vunpack.c.l.b16 %v102
  %v383 = vunpack.c.h.b16 %v102
  %v384 = vunpack.c.l.b16 %v103
  %v385 = vunpack.c.h.b16 %v103
  %v386 = vunpack.c.l.b16 %v104
  %v387 = vunpack.c.h.b16 %v104
  %v388 = vunpack.c.l.b16 %v105
  %v389 = vunpack.c.h.b16 %v105
  %v390 = vunpack.c.l.b16 %v106
  %v391 = vunpack.c.h.b16 %v106
  %v392 = vunpack.c.l.b16 %v107
  %v393 = vunpack.c.h.b16 %v107
  %v394 = vunpack.c.l.b16 %v108
  %v395 = vunpack.c.h.b16 %v108
  %v396 = vunpack.c.l.b16 %v109
  %v397 = vunpack.c.h.b16 %v109
  %v398 = vunpack.c.l.b16 %v110
  %v399 = vunpack.c.h.b16 %v110
  %v400 = vunpack.c.l.b16 %v111
  %v401 = vunpack.c.h.b16 %v111
  %v402 = vunpack.c.l.b16 %v112
  %v403 = vunpack.c.h.b16 %v112
  %v404 = vunpack.c.l.b16 %v113
  %v405 = vunpack.c.h.b16 %v113
  %v406 = vunpack.c.l.b16 %v114
  %v407 = vunpack.c.h.b16 %v114
  %v408 = vunpack.c.l.b16 %v115
  %v409 = vunpack.c.h.b16 %v115
  %v410 = vunpack.c.l.b16 %v116
  %v411 = vunpack.c.h.b16 %v116
  %v412 = vunpack.c.l.b16 %v117
  %v413 = vunpack.c.h.b16 %v117
  %v414 = vunpack.c.l.b16 %v118
  %v415 = vunpack.c.h.b16 %v118
  %v416 = vunpack.c.l.b16 %v119
  %v417 = vunpack.c.h.b16 %v119
  %v418 = vunpack.c.l.b16 %v120
  %v419 = vunpack.c.h.b16 %v120
  %v420 = vunpack.c.l.b16 %v121
  %v421 = vunpack.c.h.b16 %v121
  %v422 = vunpack.c.l.b16 %v122
  %v423 = vunpack.c.h.b16 %v122
  %v424 = vunpack.c.l.b16 %v123
  %v425 = vunpack.c.h.b16 %v123
  %v426 = vunpack.c.l.b16 %v124
  %v427 = vunpack.c.h.b16 %v124
  %v428 = vunpack.c.l.b16 %v125
  %v429 = vunpack.c.h.b16 %v125
  %v430 = vunpack.c.l.b16 %v126
  %v431 = vunpack.c.h.b16 %v126
  %v432 = vunpack.c.l.b16 %v127
  %v433 = vunpack.c.h.b16 %v127
  %v434 = vunpack.c.l.b16 %v128
  %v435 = vunpack.c.h.b16 %v128
  %v436 = vunpack.c.l.b16 %v129
  %v437 = vunpack.c.h.b16 %v129
  %v438 = vunpack.c.l.b16 %v130
  %v439 = vunpack.c.h.b16 %v130
  %v440 = vunpack.c.l.b16 %v131
  %v441 = vunpack.c.h.b16 %v131
  %v442 = vunpack.c.l.b16 %v132
  %v443 = vunpack.c.h.b16 %v132
  %v444 = vunpack.c.l.b16 %v133
  %v445 = vunpack.c.h.b16 %v133
  %v446 = vunpack.c.l.b16 %v134
  %v447 = vunpack.c.h.b16 %v134
  %v448 = vunpack.c.l.b16 %v135
  %v449 = vunpack.c.h.b16 %v135
  %v450 = vunpack.c.l.b16 %v136
  %v451 = vunpack.c.h.b16 %v136
  %v452 = vunpack.c.l.b16 %v137
  %v453 = vunpack.c.h.b16 %v137
  %v454 = vunpack.c.l.b16 %v138
  %v455 = vunpack.c.h.b16 %v138
  %v456 = vunpack.c.l.b16 %v139
  %v457 = vunpack.c.h.b16 %v139
  %v458 = vunpack.c.l.b16 %v140
  %v459 = vunpack.c.h.b16 %v140
  %v460 = vunpack.c.l.b16 %v141
  %v461 = vunpack.c.h.b16 %v141
  %v462 = vunpack.c.l.b16 %v142
  %v463 = vunpack.c.h.b16 %v142
  %v464 = vunpack.c.l.b16 %v143
  %v465 = vunpack.c.h.b16 %v143
  %v466 = vunpack.c.l.b16 %v144
  %v467 = vunpack.c.h.b16 %v144
  %v468 = vunpack.c.l.b16 %v145
  %v469 = vunpack.c.h.b16 %v145
  %v470 = vunpack.c.l.b16 %v146
  %v471 = vunpack.c.h.b16 %v146
  %v472 = vunpack.c.l.b16 %v147
  %v473 = vunpack.c.h.b16 %v147
  %v474 = vunpack.c.l.b16 %v148
  %v475 = vunpack.c.h.b16 %v148
  %v476 = vunpack.c.l.b16 %v149
  %v477 = vunpack.c.h.b16 %v149
  %v478 = vunpack.c.l.b16 %v150
  %v479 = vunpack.c.h.b16 %v150
  %v480 = vunpack.c.l.b16 %v151
  %v481 = vunpack.c.h.b16 %v151
  %v482 = vunpack.c.l.b16 %v152
  %v483 = vunpack.c.h.b16 %v152
  %v484 = vunpack.c.l.b16 %v153
  %v485 = vunpack.c.h.b16 %v153
  %v486 = vunpack.c.l.b16 %v154
  %v487 = vunpack.c.h.b16 %v154
  %v488 = vunpack.c.l.b16 %v155
  %v489 = vunpack.c.h.b16 %v155
  %v490 = vunpack.c.l.b16 %v156
  %v491 = vunpack.c.h.b16 %v156
  %v492 = vunpack.c.l.b16 %v157
  %v493 = vunpack.c.h.b16 %v157
  %v494 = vunpack.c.l.b16 %v158
  %v495 = vunpack.c.h.b16 %v158
  %v496 = vunpack.c.l.b16 %v159
  %v497 = vunpack.c.h.b16 %v159
  %v498 = vunpack.c.l.b16 %v160
  %v499 = vunpack.c.h.b16 %v160
  %v500 = vunpack.c.l.b16 %v161
  %v501 = vunpack.c.h.b16 %v161
  %v502 = vunpack.c.l.b16 %v162
  %v503 = vunpack.c.h.b16 %v162
  %v504 = vpack.c.b16 %v310, %v308
  %v505 = vpack.c.b16 %v311, %v309
  %v506 = vpack.c.b16 %v314, %v312
  %v507 = vpack.c.b16 %v315, %v313
  %v508 = vpack.c.b16 %v318, %v316
  %v509 = vpack.c.b16 %v319, %v317
  %v510 = vpack.c.b16 %v322, %v320
  %v511 = vpack.c.b16 %v323, %v321
  %v512 = vpack.c.b16 %v326, %v324
  %v513 = vpack.c.b16 %v327, %v325
  %v514 = vpack.c.b16 %v330, %v328
  %v515 = vpack.c.b16 %v331, %v329
  %v516 = vpack.c.b16 %v334, %v332
  %v517 = vpack.c.b16 %v335, %v333
  %v518 = vpack.c.b16 %v338, %v336
  %v519 = vpack.c.b16 %v339, %v337
  %v520 = vpack.c.b16 %v342, %v340
  %v521 = vpack.c.b16 %v343, %v341
  %v522 = vpack.c.b16 %v346, %v344
  %v523 = vpack.c.b16 %v347, %v345
  %v524 = vpack.c.b16 %v350, %v348
  %v525 = vpack.c.b16 %v351, %v349
  %v526 = vpack.c.b16 %v354, %v352
  %v527 = vpack.c.b16 %v355, %v353
  %v528 = vpack.c.b16 %v358, %v356
  %v529 = vpack.c.b16 %v359, %v357
  %v530 = vpack.c.b16 %v362, %v360
  %v531 = vpack.c.b16 %v363, %v361
  %v532 = vpack.c.b16 %v366, %v364
  %v533 = vpack.c.b16 %v367, %v365
  %v534 = vpack.c.b16 %v370, %v368
  %v535 = vpack.c.b16 %v371, %v369
  %v536 = vpack.c.b16 %v374, %v372
  %v537 = vpack.c.b16 %v375, %v373
  %v538 = vpack.c.b16 %v378, %v376
  %v539 = vpack.c.b16 %v379, %v377
  %v540 = vpack.c.b16 %v382, %v380
  %v541 = vpack.c.b16 %v383, %v381
  %v542 = vpack.c.b16 %v386, %v384
  %v543 = vpack.c.b16 %v387, %v385
  %v544 = vpack.c.b16 %v390, %v388
  %v545 = vpack.c.b16 %v391, %v389
  %v546 = vpack.c.b16 %v394, %v392
  %v547 = vpack.c.b16 %v395, %v393
  %v548 = vpack.c.b16 %v398, %v396
  %v549 = vpack.c.b16 %v399, %v397
  %v550 = vpack.c.b16 %v402, %v400
  %v551 = vpack.c.b16 %v403, %v401
  %v552 = vpack.c.b16 %v406, %v404
  %v553 = vpack.c.b16 %v407, %v405
  %v554 = vpack.c.b16 %v410, %v408
  %v555 = vpack.c.b16 %v411, %v409
  %v556 = vpack.c.b16 %v414, %v412
  %v557 = vpack.c.b16 %v415, %v413
  %v558 = vpack.c.b16 %v418, %v416
  %v559 = vpack.c.b16 %v419, %v417
  %v560 = vpack.c.b16 %v422, %v420
  %v561 = vpack.c.b16 %v423, %v421
  %v562 = vpack.c.b16 %v426, %v424
  %v563 = vpack.c.b16 %v427, %v425
  %v564 = vpack.c.b16 %v430, %v428
  %v565 = vpack.c.b16 %v431, %v429
  %v566 = vpack.c.b16 %v434, %v432
  %v567 = vpack.c.b16 %v435, %v433
  %v568 = vpack.c.b16 %v438, %v436
  %v569 = vpack.c.b16 %v439, %v437
  %v570 = vpack.c.b16 %v442, %v440
  %v571 = vpack.c.b16 %v443, %v441
  %v572 = vpack.c.b16 %v446, %v444
  %v573 = vpack.c.b16 %v447, %v445
  %v574 = vpack.c.b16 %v450, %v448
  %v575 = vpack.c.b16 %v451, %v449
  %v576 = vpack.c.b16 %v454, %v452
  %v577 = vpack.c.b16 %v455, %v453
  %v578 = vpack.c.b16 %v458, %v456
  %v579 = vpack.c.b16 %v459, %v457
  %v580 = vpack.c.b16 %v462, %v460
  %v581 = vpack.c.b16 %v463, %v461
  %v582 = vpack.c.b16 %v466, %v464
  %v583 = vpack.c.b16 %v467, %v465
  %v584 = vpack.c.b16 %v470, %v468
  %v585 = vpack.c.b16 %v471, %v469
  %v586 = vpack.c.b16 %v474, %v472
  %v587 = vpack.c.b16 %v475, %v473
  %v588 = vpack.c.b16 %v478, %v476
  %v589 = vpack.c.b16 %v479, %v477
  %v590 = vpack.c.b16 %v482, %v480
  %v591 = vpack.c.b16 %v483, %v481
  %v592 = vpack.c.b16 %v486, %v484
  %v593 = vpack.c.b16 %v487, %v485
  %v594 = vpack.c.b16 %v490, %v488
  %v595 = vpack.c.b16 %v491, %v489
  %v596 = vpack.c.b16 %v494, %v492
  %v597 = vpack.c.b16 %v495, %v493
  %v598 = vpack.c.b16 %v498, %v496
  %v599 = vpack.c.b16 %v499, %v497
  %v600 = vpack.c.b16 %v502, %v500
  %v601 = vpack.c.b16 %v503, %v501
  %vm700 = vcmask 130048
  %v702 = vsel %vm700, %v203, 0
  %704 = vmatprep.subr.bf16.mxu0 %v519
  %705 = vmatpush1.bf16.msra.mxu0 %v518
  %706 = vmatprep.subr.bf16.mxu0 %v517
  %707 = vmatpush1.bf16.msra.mxu0 %v516
  %708 = vmatprep.subr.bf16.mxu0 %v515
  %709 = vmatpush1.bf16.msra.mxu0 %v514
  %710 = vmatprep.subr.bf16.mxu0 %v513
  %711 = vmatpush1.bf16.msra.mxu0 %v512
  %712 = vmatprep.subr.bf16.mxu0 %v511
  %713 = vmatpush1.bf16.msra.mxu0 %v510
  %714 = vmatprep.subr.bf16.mxu0 %v509
  %715 = vmatpush1.bf16.msra.mxu0 %v508
  %716 = vmatprep.subr.bf16.mxu0 %v507
  %717 = vmatpush1.bf16.msra.mxu0 %v506
  %718 = vmatprep.subr.bf16.mxu0 %v505
  %719 = vmatpush1.bf16.msra.mxu0 %v504
  %720 = vmatprep.subr.bf16.mxu0 %v535
  %721 = vmatpush2.bf16.msra.mxu0 %v534
  %722 = vmatprep.subr.bf16.mxu0 %v533
  %723 = vmatpush2.bf16.msra.mxu0 %v532
  %724 = vmatprep.subr.bf16.mxu0 %v531
  %725 = vmatpush2.bf16.msra.mxu0 %v530
  %726 = vmatprep.subr.bf16.mxu0 %v529
  %727 = vmatpush2.bf16.msra.mxu0 %v528
  %728 = vmatprep.subr.bf16.mxu0 %v527
  %729 = vmatpush2.bf16.msra.mxu0 %v526
  %730 = vmatprep.subr.bf16.mxu0 %v525
  %731 = vmatpush2.bf16.msra.mxu0 %v524
  %732 = vmatprep.subr.bf16.mxu0 %v523
  %733 = vmatpush2.bf16.msra.mxu0 %v522
  %734 = vmatprep.subr.bf16.mxu0 %v521
  %735 = vmatpush2.bf16.msra.mxu0 %v520
  %736 = vmatprep.mubr.bf16.mxu0 %v198
  %737 = vmatmul.mubr.bf16.gmra.mxu0 %v197
  %v738 = vpop.f32.mrf.mxu0
  %v739 = vadd.f32 %v168, %v738
  %v740 = vpop.f32.mrf.mxu0
  %v741 = vadd.f32 %v172, %v740
  %v742 = vpop.f32.mrf.mxu0
  %v743 = vadd.f32 %v168, %v742
  %v744 = vpop.f32.mrf.mxu0
  %v745 = vadd.f32 %v172, %v744
  %746 = vdwg.mxu0
  %747 = vmatprep.subr.bf16.mxu0 %v551
  %748 = vmatpush1.bf16.msra.mxu0 %v550
  %749 = vmatprep.subr.bf16.mxu0 %v549
  %750 = vmatpush1.bf16.msra.mxu0 %v548
  %751 = vmatprep.subr.bf16.mxu0 %v547
  %752 = vmatpush1.bf16.msra.mxu0 %v546
  %753 = vmatprep.subr.bf16.mxu0 %v545
  %754 = vmatpush1.bf16.msra.mxu0 %v544
  %755 = vmatprep.subr.bf16.mxu0 %v543
  %756 = vmatpush1.bf16.msra.mxu0 %v542
  %757 = vmatprep.subr.bf16.mxu0 %v541
  %758 = vmatpush1.bf16.msra.mxu0 %v540
  %759 = vmatprep.subr.bf16.mxu0 %v539
  %760 = vmatpush1.bf16.msra.mxu0 %v538
  %761 = vmatprep.subr.bf16.mxu0 %v537
  %762 = vmatpush1.bf16.msra.mxu0 %v536
  %763 = vmatprep.subr.bf16.mxu0 %v567
  %764 = vmatpush2.bf16.msra.mxu0 %v566
  %765 = vmatprep.subr.bf16.mxu0 %v565
  %766 = vmatpush2.bf16.msra.mxu0 %v564
  %767 = vmatprep.subr.bf16.mxu0 %v563
  %768 = vmatpush2.bf16.msra.mxu0 %v562
  %769 = vmatprep.subr.bf16.mxu0 %v561
  %770 = vmatpush2.bf16.msra.mxu0 %v560
  %771 = vmatprep.subr.bf16.mxu0 %v559
  %772 = vmatpush2.bf16.msra.mxu0 %v558
  %773 = vmatprep.subr.bf16.mxu0 %v557
  %774 = vmatpush2.bf16.msra.mxu0 %v556
  %775 = vmatprep.subr.bf16.mxu0 %v555
  %776 = vmatpush2.bf16.msra.mxu0 %v554
  %777 = vmatprep.subr.bf16.mxu0 %v553
  %778 = vmatpush2.bf16.msra.mxu0 %v552
  %779 = vmatprep.mubr.bf16.mxu0 %v200
  %780 = vmatmul.mubr.bf16.gmra.mxu0 %v199
  %v781 = vpop.f32.mrf.mxu0
  %v782 = vadd.f32 %v739, %v781
  %v783 = vpop.f32.mrf.mxu0
  %v784 = vadd.f32 %v741, %v783
  %v785 = vpop.f32.mrf.mxu0
  %v786 = vadd.f32 %v743, %v785
  %v787 = vpop.f32.mrf.mxu0
  %v788 = vadd.f32 %v745, %v787
  %789 = vdwg.mxu0
  %790 = vmatprep.subr.bf16.mxu0 %v583
  %791 = vmatpush1.bf16.msra.mxu0 %v582
  %792 = vmatprep.subr.bf16.mxu0 %v581
  %793 = vmatpush1.bf16.msra.mxu0 %v580
  %794 = vmatprep.subr.bf16.mxu0 %v579
  %795 = vmatpush1.bf16.msra.mxu0 %v578
  %796 = vmatprep.subr.bf16.mxu0 %v577
  %797 = vmatpush1.bf16.msra.mxu0 %v576
  %798 = vmatprep.subr.bf16.mxu0 %v575
  %799 = vmatpush1.bf16.msra.mxu0 %v574
  %800 = vmatprep.subr.bf16.mxu0 %v573
  %801 = vmatpush1.bf16.msra.mxu0 %v572
  %802 = vmatprep.subr.bf16.mxu0 %v571
  %803 = vmatpush1.bf16.msra.mxu0 %v570
  %804 = vmatprep.subr.bf16.mxu0 %v569
  %805 = vmatpush1.bf16.msra.mxu0 %v568
  %806 = vmatprep.subr.bf16.mxu0 %v599
  %807 = vmatpush2.bf16.msra.mxu0 %v598
  %808 = vmatprep.subr.bf16.mxu0 %v597
  %809 = vmatpush2.bf16.msra.mxu0 %v596
  %810 = vmatprep.subr.bf16.mxu0 %v595
  %811 = vmatpush2.bf16.msra.mxu0 %v594
  %812 = vmatprep.subr.bf16.mxu0 %v593
  %813 = vmatpush2.bf16.msra.mxu0 %v592
  %814 = vmatprep.subr.bf16.mxu0 %v591
  %815 = vmatpush2.bf16.msra.mxu0 %v590
  %816 = vmatprep.subr.bf16.mxu0 %v589
  %817 = vmatpush2.bf16.msra.mxu0 %v588
  %818 = vmatprep.subr.bf16.mxu0 %v587
  %819 = vmatpush2.bf16.msra.mxu0 %v586
  %820 = vmatprep.subr.bf16.mxu0 %v585
  %821 = vmatpush2.bf16.msra.mxu0 %v584
  %822 = vmatprep.mubr.bf16.mxu0 %v202
  %823 = vmatmul.mubr.bf16.gmra.mxu0 %v201
  %v824 = vpop.f32.mrf.mxu0
  %v825 = vadd.f32 %v782, %v824
  %v826 = vpop.f32.mrf.mxu0
  %v827 = vadd.f32 %v784, %v826
  %v828 = vpop.f32.mrf.mxu0
  %v829 = vadd.f32 %v786, %v828
  %v830 = vpop.f32.mrf.mxu0
  %v831 = vadd.f32 %v788, %v830
  %832 = vdwg.mxu0
  %833 = vmatprep.subr.bf16.mxu0 0
  %834 = vmatpush1.bf16.msra.mxu0 0
  %835 = vmatprep.subr.bf16.mxu0 0
  %836 = vmatpush1.bf16.msra.mxu0 0
  %837 = vmatprep.subr.bf16.mxu0 0
  %838 = vmatpush1.bf16.msra.mxu0 0
  %839 = vmatprep.subr.bf16.mxu0 0
  %840 = vmatpush1.bf16.msra.mxu0 0
  %841 = vmatprep.subr.bf16.mxu0 0
  %842 = vmatpush1.bf16.msra.mxu0 0
  %843 = vmatprep.subr.bf16.mxu0 0
  %844 = vmatpush1.bf16.msra.mxu0 0
  %845 = vmatprep.subr.bf16.mxu0 0
  %846 = vmatpush1.bf16.msra.mxu0 0
  %847 = vmatprep.subr.bf16.mxu0 %v601
  %848 = vmatpush1.bf16.msra.mxu0 %v600
  %849 = vmatprep.subr.bf16.mxu0 0
  %850 = vmatpush2.bf16.msra.mxu0 0
  %851 = vmatprep.subr.bf16.mxu0 0
  %852 = vmatpush2.bf16.msra.mxu0 0
  %853 = vmatprep.subr.bf16.mxu0 0
  %854 = vmatpush2.bf16.msra.mxu0 0
  %855 = vmatprep.subr.bf16.mxu0 0
  %856 = vmatpush2.bf16.msra.mxu0 0
  %857 = vmatprep.subr.bf16.mxu0 0
  %858 = vmatpush2.bf16.msra.mxu0 0
  %859 = vmatprep.subr.bf16.mxu0 0
  %860 = vmatpush2.bf16.msra.mxu0 0
  %861 = vmatprep.subr.bf16.mxu0 0
  %862 = vmatpush2.bf16.msra.mxu0 0
  %863 = vmatprep.subr.bf16.mxu0 0
  %864 = vmatpush2.bf16.msra.mxu0 0
  %865 = vmatprep.mubr.bf16.mxu0 0
  %866 = vmatmul.mubr.bf16.gmra.mxu0 %v702
  %v867 = vpop.f32.mrf.mxu0
  %v868 = vadd.f32 %v825, %v867
  %v869 = vpop.f32.mrf.mxu0
  %v870 = vadd.f32 %v827, %v869
  %v871 = vpop.f32.mrf.mxu0
  %v872 = vadd.f32 %v829, %v871
  %v873 = vpop.f32.mrf.mxu0
  %v874 = vadd.f32 %v831, %v873
  %875 = vdwg.mxu0
  %v876 = vmax.f32 %v868, 0.0
  %v877 = vmax.f32 %v870, 0.0
  %v878 = vmax.f32 %v872, 0.0
  %v879 = vmax.f32 %v874, 0.0
  %v880 = vpack.c.bf16 %v878, %v876
  %v881 = vpack.c.bf16 %v879, %v877
  %v882 = vld [vmem:[%s4] sm:$0xff]
  %v883 = vld [vmem:[%s4 + $0x8] sm:$0xff]
  %v884 = vld [vmem:[%s4 + $0x10] sm:$0xff]
  %v885 = vld [vmem:[%s4 + $0x18] sm:$0xff]
  %v886 = vld [vmem:[%s4 + $0x20] sm:$0xff]
  %v887 = vld [vmem:[%s4 + $0x28] sm:$0xff]
  %v888 = vld [vmem:[%s4 + $0x30] sm:$0xff]
  %v889 = vld [vmem:[%s4 + $0x38] sm:$0xff]
  %v890 = vld [vmem:[%s4 + $0x40] sm:$0xff]
  %v891 = vld [vmem:[%s4 + $0x48] sm:$0xff]
  %v892 = vld [vmem:[%s4 + $0x50] sm:$0xff]
  %v893 = vld [vmem:[%s4 + $0x58] sm:$0xff]
  %v894 = vld [vmem:[%s4 + $0x60] sm:$0xff]
  %v895 = vld [vmem:[%s4 + $0x68] sm:$0xff]
  %v896 = vld [vmem:[%s4 + $0x70] sm:$0xff]
  %v897 = vld [vmem:[%s4 + $0x78] sm:$0xff]
  %v898 = vld [vmem:[%s4 + $0x80] sm:$0xff]
  %v899 = vld [vmem:[%s4 + $0x88] sm:$0xff]
  %v900 = vld [vmem:[%s4 + $0x90] sm:$0xff]
  %v901 = vld [vmem:[%s4 + $0x98] sm:$0xff]
  %v902 = vld [vmem:[%s4 + $0xa0] sm:$0xff]
  %v903 = vld [vmem:[%s4 + $0xa8] sm:$0xff]
  %v904 = vld [vmem:[%s4 + $0xb0] sm:$0xff]
  %v905 = vld [vmem:[%s4 + $0xb8] sm:$0xff]
  %v906 = vld [vmem:[%s4 + $0xc0] sm:$0xff]
  %v907 = vld [vmem:[%s4 + $0xc8] sm:$0xff]
  %v908 = vld [vmem:[%s4 + $0xd0] sm:$0xff]
  %v909 = vld [vmem:[%s4 + $0xd8] sm:$0xff]
  %v910 = vld [vmem:[%s4 + $0xe0] sm:$0xff]
  %v911 = vld [vmem:[%s4 + $0xe8] sm:$0xff]
  %v912 = vld [vmem:[%s4 + $0xf0] sm:$0xff]
  %v913 = vld [vmem:[%s4 + $0xf8] sm:$0xff]
  %v914 = vld [vmem:[%s5] sm:$0x3]
  %v916 = vlaneseq
  %v917 = vshrl.u32 %v916, 7
  %v918 = vsub.s32 0, %v917
  %v919 = vrot.slane %v914, %v918
  %v920 = vlaneseq
  %v921 = vshrl.u32 %v920, 7
  %v922 = vsub.s32 1, %v921
  %v923 = vrot.slane %v914, %v922
  %v958 = vunpack.c.l.b16 %v882
  %v959 = vunpack.c.h.b16 %v882
  %v960 = vunpack.c.l.b16 %v883
  %v961 = vunpack.c.h.b16 %v883
  %v962 = vunpack.c.l.b16 %v884
  %v963 = vunpack.c.h.b16 %v884
  %v964 = vunpack.c.l.b16 %v885
  %v965 = vunpack.c.h.b16 %v885
  %v966 = vunpack.c.l.b16 %v886
  %v967 = vunpack.c.h.b16 %v886
  %v968 = vunpack.c.l.b16 %v887
  %v969 = vunpack.c.h.b16 %v887
  %v970 = vunpack.c.l.b16 %v888
  %v971 = vunpack.c.h.b16 %v888
  %v972 = vunpack.c.l.b16 %v889
  %v973 = vunpack.c.h.b16 %v889
  %v974 = vunpack.c.l.b16 %v890
  %v975 = vunpack.c.h.b16 %v890
  %v976 = vunpack.c.l.b16 %v891
  %v977 = vunpack.c.h.b16 %v891
  %v978 = vunpack.c.l.b16 %v892
  %v979 = vunpack.c.h.b16 %v892
  %v980 = vunpack.c.l.b16 %v893
  %v981 = vunpack.c.h.b16 %v893
  %v982 = vunpack.c.l.b16 %v894
  %v983 = vunpack.c.h.b16 %v894
  %v984 = vunpack.c.l.b16 %v895
  %v985 = vunpack.c.h.b16 %v895
  %v986 = vunpack.c.l.b16 %v896
  %v987 = vunpack.c.h.b16 %v896
  %v988 = vunpack.c.l.b16 %v897
  %v989 = vunpack.c.h.b16 %v897
  %v990 = vunpack.c.l.b16 %v898
  %v991 = vunpack.c.h.b16 %v898
  %v992 = vunpack.c.l.b16 %v899
  %v993 = vunpack.c.h.b16 %v899
  %v994 = vunpack.c.l.b16 %v900
  %v995 = vunpack.c.h.b16 %v900
  %v996 = vunpack.c.l.b16 %v901
  %v997 = vunpack.c.h.b16 %v901
  %v998 = vunpack.c.l.b16 %v902
  %v999 = vunpack.c.h.b16 %v902
  %v1000 = vunpack.c.l.b16 %v903
  %v1001 = vunpack.c.h.b16 %v903
  %v1002 = vunpack.c.l.b16 %v904
  %v1003 = vunpack.c.h.b16 %v904
  %v1004 = vunpack.c.l.b16 %v905
  %v1005 = vunpack.c.h.b16 %v905
  %v1006 = vunpack.c.l.b16 %v906
  %v1007 = vunpack.c.h.b16 %v906
  %v1008 = vunpack.c.l.b16 %v907
  %v1009 = vunpack.c.h.b16 %v907
  %v1010 = vunpack.c.l.b16 %v908
  %v1011 = vunpack.c.h.b16 %v908
  %v1012 = vunpack.c.l.b16 %v909
  %v1013 = vunpack.c.h.b16 %v909
  %v1014 = vunpack.c.l.b16 %v910
  %v1015 = vunpack.c.h.b16 %v910
  %v1016 = vunpack.c.l.b16 %v911
  %v1017 = vunpack.c.h.b16 %v911
  %v1018 = vunpack.c.l.b16 %v912
  %v1019 = vunpack.c.h.b16 %v912
  %v1020 = vunpack.c.l.b16 %v913
  %v1021 = vunpack.c.h.b16 %v913
  %v1022 = vpack.c.b16 %v960, %v958
  %v1023 = vpack.c.b16 %v961, %v959
  %v1024 = vpack.c.b16 %v964, %v962
  %v1025 = vpack.c.b16 %v965, %v963
  %v1026 = vpack.c.b16 %v968, %v966
  %v1027 = vpack.c.b16 %v969, %v967
  %v1028 = vpack.c.b16 %v972, %v970
  %v1029 = vpack.c.b16 %v973, %v971
  %v1030 = vpack.c.b16 %v976, %v974
  %v1031 = vpack.c.b16 %v977, %v975
  %v1032 = vpack.c.b16 %v980, %v978
  %v1033 = vpack.c.b16 %v981, %v979
  %v1034 = vpack.c.b16 %v984, %v982
  %v1035 = vpack.c.b16 %v985, %v983
  %v1036 = vpack.c.b16 %v988, %v986
  %v1037 = vpack.c.b16 %v989, %v987
  %v1038 = vpack.c.b16 %v992, %v990
  %v1039 = vpack.c.b16 %v993, %v991
  %v1040 = vpack.c.b16 %v996, %v994
  %v1041 = vpack.c.b16 %v997, %v995
  %v1042 = vpack.c.b16 %v1000, %v998
  %v1043 = vpack.c.b16 %v1001, %v999
  %v1044 = vpack.c.b16 %v1004, %v1002
  %v1045 = vpack.c.b16 %v1005, %v1003
  %v1046 = vpack.c.b16 %v1008, %v1006
  %v1047 = vpack.c.b16 %v1009, %v1007
  %v1048 = vpack.c.b16 %v1012, %v1010
  %v1049 = vpack.c.b16 %v1013, %v1011
  %v1050 = vpack.c.b16 %v1016, %v1014
  %v1051 = vpack.c.b16 %v1017, %v1015
  %v1052 = vpack.c.b16 %v1020, %v1018
  %v1053 = vpack.c.b16 %v1021, %v1019
  %1086 = vmatprep.subr.bf16.mxu0 %v1037
  %1087 = vmatpush1.bf16.msra.mxu0 %v1036
  %1088 = vmatprep.subr.bf16.mxu0 %v1035
  %1089 = vmatpush1.bf16.msra.mxu0 %v1034
  %1090 = vmatprep.subr.bf16.mxu0 %v1033
  %1091 = vmatpush1.bf16.msra.mxu0 %v1032
  %1092 = vmatprep.subr.bf16.mxu0 %v1031
  %1093 = vmatpush1.bf16.msra.mxu0 %v1030
  %1094 = vmatprep.subr.bf16.mxu0 %v1029
  %1095 = vmatpush1.bf16.msra.mxu0 %v1028
  %1096 = vmatprep.subr.bf16.mxu0 %v1027
  %1097 = vmatpush1.bf16.msra.mxu0 %v1026
  %1098 = vmatprep.subr.bf16.mxu0 %v1025
  %1099 = vmatpush1.bf16.msra.mxu0 %v1024
  %1100 = vmatprep.subr.bf16.mxu0 %v1023
  %1101 = vmatpush1.bf16.msra.mxu0 %v1022
  %1102 = vmatprep.subr.bf16.mxu0 %v1053
  %1103 = vmatpush2.bf16.msra.mxu0 %v1052
  %1104 = vmatprep.subr.bf16.mxu0 %v1051
  %1105 = vmatpush2.bf16.msra.mxu0 %v1050
  %1106 = vmatprep.subr.bf16.mxu0 %v1049
  %1107 = vmatpush2.bf16.msra.mxu0 %v1048
  %1108 = vmatprep.subr.bf16.mxu0 %v1047
  %1109 = vmatpush2.bf16.msra.mxu0 %v1046
  %1110 = vmatprep.subr.bf16.mxu0 %v1045
  %1111 = vmatpush2.bf16.msra.mxu0 %v1044
  %1112 = vmatprep.subr.bf16.mxu0 %v1043
  %1113 = vmatpush2.bf16.msra.mxu0 %v1042
  %1114 = vmatprep.subr.bf16.mxu0 %v1041
  %1115 = vmatpush2.bf16.msra.mxu0 %v1040
  %1116 = vmatprep.subr.bf16.mxu0 %v1039
  %1117 = vmatpush2.bf16.msra.mxu0 %v1038
  %1118 = vmatprep.mubr.bf16.mxu0 %v881
  %1119 = vmatmul.mubr.bf16.gmra.mxu0 %v880
  %v1120 = vpop.f32.mrf.mxu0
  %v1121 = vadd.f32 %v919, %v1120
  %v1122 = vpop.f32.mrf.mxu0
  %v1123 = vadd.f32 %v923, %v1122
  %v1124 = vpop.f32.mrf.mxu0
  %v1125 = vadd.f32 %v919, %v1124
  %v1126 = vpop.f32.mrf.mxu0
  %v1127 = vadd.f32 %v923, %v1126
  %1128 = vdwg.mxu0
  %v1129 = vmax.f32 %v1121, 0.0
  %v1130 = vmax.f32 %v1123, 0.0
  %v1131 = vmax.f32 %v1125, 0.0
  %v1132 = vmax.f32 %v1127, 0.0
  %v1133 = vpack.c.bf16 %v1131, %v1129
  %v1134 = vpack.c.bf16 %v1132, %v1130
  %v1135 = vld [vmem:[%s6] sm:$0xf]
  %v1136 = vld [vmem:[%s6 + $0x4] sm:$0xf]
  %v1137 = vld [vmem:[%s6 + $0x8] sm:$0xf]
  %v1138 = vld [vmem:[%s6 + $0xc] sm:$0xf]
  %v1139 = vld [vmem:[%s6 + $0x10] sm:$0xf]
  %v1140 = vld [vmem:[%s6 + $0x14] sm:$0xf]
  %v1141 = vld [vmem:[%s6 + $0x18] sm:$0xf]
  %v1142 = vld [vmem:[%s6 + $0x1c] sm:$0xf]
  %v1143 = vld [vmem:[%s6 + $0x20] sm:$0xf]
  %v1144 = vld [vmem:[%s6 + $0x24] sm:$0xf]
  %v1145 = vld [vmem:[%s6 + $0x28] sm:$0xf]
  %v1146 = vld [vmem:[%s6 + $0x2c] sm:$0xf]
  %v1147 = vld [vmem:[%s6 + $0x30] sm:$0xf]
  %v1148 = vld [vmem:[%s6 + $0x34] sm:$0xf]
  %v1149 = vld [vmem:[%s6 + $0x38] sm:$0xf]
  %v1150 = vld [vmem:[%s6 + $0x3c] sm:$0xf]
  %v1151 = vld [vmem:[%s6 + $0x40] sm:$0xf]
  %v1152 = vld [vmem:[%s6 + $0x44] sm:$0xf]
  %v1153 = vld [vmem:[%s6 + $0x48] sm:$0xf]
  %v1154 = vld [vmem:[%s6 + $0x4c] sm:$0xf]
  %v1155 = vld [vmem:[%s6 + $0x50] sm:$0xf]
  %v1156 = vld [vmem:[%s6 + $0x54] sm:$0xf]
  %v1157 = vld [vmem:[%s6 + $0x58] sm:$0xf]
  %v1158 = vld [vmem:[%s6 + $0x5c] sm:$0xf]
  %v1159 = vld [vmem:[%s6 + $0x60] sm:$0xf]
  %v1160 = vld [vmem:[%s6 + $0x64] sm:$0xf]
  %v1161 = vld [vmem:[%s6 + $0x68] sm:$0xf]
  %v1162 = vld [vmem:[%s6 + $0x6c] sm:$0xf]
  %v1163 = vld [vmem:[%s6 + $0x70] sm:$0xf]
  %v1164 = vld [vmem:[%s6 + $0x74] sm:$0xf]
  %v1165 = vld [vmem:[%s6 + $0x78] sm:$0xf]
  %v1166 = vld [vmem:[%s6 + $0x7c] sm:$0xf]
  %v1167 = vld [vmem:[%s7] sm:$0x1]
  %v1169 = vlaneseq
  %v1170 = vshrl.u32 %v1169, 7
  %v1171 = vsub.s32 0, %v1170
  %v1172 = vrot.slane %v1167, %v1171
  %v1206 = vunpack.c.l.b16 %v1135
  %v1207 = vunpack.c.l.b16 %v1136
  %v1208 = vunpack.c.l.b16 %v1137
  %v1209 = vunpack.c.l.b16 %v1138
  %v1210 = vunpack.c.l.b16 %v1139
  %v1211 = vunpack.c.l.b16 %v1140
  %v1212 = vunpack.c.l.b16 %v1141
  %v1213 = vunpack.c.l.b16 %v1142
  %v1214 = vunpack.c.l.b16 %v1143
  %v1215 = vunpack.c.l.b16 %v1144
  %v1216 = vunpack.c.l.b16 %v1145
  %v1217 = vunpack.c.l.b16 %v1146
  %v1218 = vunpack.c.l.b16 %v1147
  %v1219 = vunpack.c.l.b16 %v1148
  %v1220 = vunpack.c.l.b16 %v1149
  %v1221 = vunpack.c.l.b16 %v1150
  %v1222 = vunpack.c.l.b16 %v1151
  %v1223 = vunpack.c.l.b16 %v1152
  %v1224 = vunpack.c.l.b16 %v1153
  %v1225 = vunpack.c.l.b16 %v1154
  %v1226 = vunpack.c.l.b16 %v1155
  %v1227 = vunpack.c.l.b16 %v1156
  %v1228 = vunpack.c.l.b16 %v1157
  %v1229 = vunpack.c.l.b16 %v1158
  %v1230 = vunpack.c.l.b16 %v1159
  %v1231 = vunpack.c.l.b16 %v1160
  %v1232 = vunpack.c.l.b16 %v1161
  %v1233 = vunpack.c.l.b16 %v1162
  %v1234 = vunpack.c.l.b16 %v1163
  %v1235 = vunpack.c.l.b16 %v1164
  %v1236 = vunpack.c.l.b16 %v1165
  %v1237 = vunpack.c.l.b16 %v1166
  %v1238 = vpack.c.b16 %v1207, %v1206
  %v1239 = vpack.c.b16 %v1209, %v1208
  %v1240 = vpack.c.b16 %v1211, %v1210
  %v1241 = vpack.c.b16 %v1213, %v1212
  %v1242 = vpack.c.b16 %v1215, %v1214
  %v1243 = vpack.c.b16 %v1217, %v1216
  %v1244 = vpack.c.b16 %v1219, %v1218
  %v1245 = vpack.c.b16 %v1221, %v1220
  %v1246 = vpack.c.b16 %v1223, %v1222
  %v1247 = vpack.c.b16 %v1225, %v1224
  %v1248 = vpack.c.b16 %v1227, %v1226
  %v1249 = vpack.c.b16 %v1229, %v1228
  %v1250 = vpack.c.b16 %v1231, %v1230
  %v1251 = vpack.c.b16 %v1233, %v1232
  %v1252 = vpack.c.b16 %v1235, %v1234
  %v1253 = vpack.c.b16 %v1237, %v1236
  %1270 = vmatprep.subr.bf16.mxu0 0
  %1271 = vmatpush1.bf16.msra.mxu0 %v1245
  %1272 = vmatprep.subr.bf16.mxu0 0
  %1273 = vmatpush1.bf16.msra.mxu0 %v1244
  %1274 = vmatprep.subr.bf16.mxu0 0
  %1275 = vmatpush1.bf16.msra.mxu0 %v1243
  %1276 = vmatprep.subr.bf16.mxu0 0
  %1277 = vmatpush1.bf16.msra.mxu0 %v1242
  %1278 = vmatprep.subr.bf16.mxu0 0
  %1279 = vmatpush1.bf16.msra.mxu0 %v1241
  %1280 = vmatprep.subr.bf16.mxu0 0
  %1281 = vmatpush1.bf16.msra.mxu0 %v1240
  %1282 = vmatprep.subr.bf16.mxu0 0
  %1283 = vmatpush1.bf16.msra.mxu0 %v1239
  %1284 = vmatprep.subr.bf16.mxu0 0
  %1285 = vmatpush1.bf16.msra.mxu0 %v1238
  %1286 = vmatprep.subr.bf16.mxu0 0
  %1287 = vmatpush2.bf16.msra.mxu0 %v1253
  %1288 = vmatprep.subr.bf16.mxu0 0
  %1289 = vmatpush2.bf16.msra.mxu0 %v1252
  %1290 = vmatprep.subr.bf16.mxu0 0
  %1291 = vmatpush2.bf16.msra.mxu0 %v1251
  %1292 = vmatprep.subr.bf16.mxu0 0
  %1293 = vmatpush2.bf16.msra.mxu0 %v1250
  %1294 = vmatprep.subr.bf16.mxu0 0
  %1295 = vmatpush2.bf16.msra.mxu0 %v1249
  %1296 = vmatprep.subr.bf16.mxu0 0
  %1297 = vmatpush2.bf16.msra.mxu0 %v1248
  %1298 = vmatprep.subr.bf16.mxu0 0
  %1299 = vmatpush2.bf16.msra.mxu0 %v1247
  %1300 = vmatprep.subr.bf16.mxu0 0
  %1301 = vmatpush2.bf16.msra.mxu0 %v1246
  %1302 = vmatprep.mubr.bf16.mxu0 %v1134
  %1303 = vmatmul.mubr.bf16.gmra.mxu0 %v1133
  %v1304 = vpop.f32.mrf.mxu0
  %v1305 = vadd.f32 %v1172, %v1304
  %v1306 = vpop.f32.mrf.mxu0
  %v1307 = vpop.f32.mrf.mxu0
  %v1308 = vadd.f32 %v1172, %v1307
  %v1309 = vpop.f32.mrf.mxu0
  %1310 = vdwg.mxu0
  %v1311 = vld [vmem:[%s8] sm:$0xf]
  %v1312 = vld [vmem:[%s8 + $0x4] sm:$0xf]
  %v1313 = vld [vmem:[%s8 + $0x8] sm:$0xf]
  %v1314 = vld [vmem:[%s8 + $0xc] sm:$0xf]
  %v1315 = vld [vmem:[%s8 + $0x10] sm:$0xf]
  %v1316 = vld [vmem:[%s8 + $0x14] sm:$0xf]
  %v1317 = vld [vmem:[%s8 + $0x18] sm:$0xf]
  %v1318 = vld [vmem:[%s8 + $0x1c] sm:$0xf]
  %v1319 = vld [vmem:[%s8 + $0x20] sm:$0xf]
  %v1320 = vld [vmem:[%s8 + $0x24] sm:$0xf]
  %v1321 = vld [vmem:[%s8 + $0x28] sm:$0xf]
  %v1322 = vld [vmem:[%s8 + $0x2c] sm:$0xf]
  %v1323 = vld [vmem:[%s8 + $0x30] sm:$0xf]
  %v1324 = vld [vmem:[%s8 + $0x34] sm:$0xf]
  %v1325 = vld [vmem:[%s8 + $0x38] sm:$0xf]
  %v1326 = vld [vmem:[%s8 + $0x3c] sm:$0xf]
  %v1327 = vld [vmem:[%s8 + $0x40] sm:$0xf]
  %v1328 = vld [vmem:[%s8 + $0x44] sm:$0xf]
  %v1329 = vld [vmem:[%s8 + $0x48] sm:$0xf]
  %v1330 = vld [vmem:[%s8 + $0x4c] sm:$0xf]
  %v1331 = vld [vmem:[%s8 + $0x50] sm:$0xf]
  %v1332 = vld [vmem:[%s8 + $0x54] sm:$0xf]
  %v1333 = vld [vmem:[%s8 + $0x58] sm:$0xf]
  %v1334 = vld [vmem:[%s8 + $0x5c] sm:$0xf]
  %v1335 = vld [vmem:[%s8 + $0x60] sm:$0xf]
  %v1336 = vld [vmem:[%s8 + $0x64] sm:$0xf]
  %v1337 = vld [vmem:[%s8 + $0x68] sm:$0xf]
  %v1338 = vld [vmem:[%s8 + $0x6c] sm:$0xf]
  %v1339 = vld [vmem:[%s8 + $0x70] sm:$0xf]
  %v1340 = vld [vmem:[%s8 + $0x74] sm:$0xf]
  %v1341 = vld [vmem:[%s8 + $0x78] sm:$0xf]
  %v1342 = vld [vmem:[%s8 + $0x7c] sm:$0xf]
  %v1343 = vld [vmem:[%s9] sm:$0x1]
  %v1345 = vlaneseq
  %v1346 = vshrl.u32 %v1345, 7
  %v1347 = vsub.s32 0, %v1346
  %v1348 = vrot.slane %v1343, %v1347
  %v1382 = vunpack.c.l.b16 %v1311
  %v1383 = vunpack.c.l.b16 %v1312
  %v1384 = vunpack.c.l.b16 %v1313
  %v1385 = vunpack.c.l.b16 %v1314
  %v1386 = vunpack.c.l.b16 %v1315
  %v1387 = vunpack.c.l.b16 %v1316
  %v1388 = vunpack.c.l.b16 %v1317
  %v1389 = vunpack.c.l.b16 %v1318
  %v1390 = vunpack.c.l.b16 %v1319
  %v1391 = vunpack.c.l.b16 %v1320
  %v1392 = vunpack.c.l.b16 %v1321
  %v1393 = vunpack.c.l.b16 %v1322
  %v1394 = vunpack.c.l.b16 %v1323
  %v1395 = vunpack.c.l.b16 %v1324
  %v1396 = vunpack.c.l.b16 %v1325
  %v1397 = vunpack.c.l.b16 %v1326
  %v1398 = vunpack.c.l.b16 %v1327
  %v1399 = vunpack.c.l.b16 %v1328
  %v1400 = vunpack.c.l.b16 %v1329
  %v1401 = vunpack.c.l.b16 %v1330
  %v1402 = vunpack.c.l.b16 %v1331
  %v1403 = vunpack.c.l.b16 %v1332
  %v1404 = vunpack.c.l.b16 %v1333
  %v1405 = vunpack.c.l.b16 %v1334
  %v1406 = vunpack.c.l.b16 %v1335
  %v1407 = vunpack.c.l.b16 %v1336
  %v1408 = vunpack.c.l.b16 %v1337
  %v1409 = vunpack.c.l.b16 %v1338
  %v1410 = vunpack.c.l.b16 %v1339
  %v1411 = vunpack.c.l.b16 %v1340
  %v1412 = vunpack.c.l.b16 %v1341
  %v1413 = vunpack.c.l.b16 %v1342
  %v1414 = vpack.c.b16 %v1383, %v1382
  %v1415 = vpack.c.b16 %v1385, %v1384
  %v1416 = vpack.c.b16 %v1387, %v1386
  %v1417 = vpack.c.b16 %v1389, %v1388
  %v1418 = vpack.c.b16 %v1391, %v1390
  %v1419 = vpack.c.b16 %v1393, %v1392
  %v1420 = vpack.c.b16 %v1395, %v1394
  %v1421 = vpack.c.b16 %v1397, %v1396
  %v1422 = vpack.c.b16 %v1399, %v1398
  %v1423 = vpack.c.b16 %v1401, %v1400
  %v1424 = vpack.c.b16 %v1403, %v1402
  %v1425 = vpack.c.b16 %v1405, %v1404
  %v1426 = vpack.c.b16 %v1407, %v1406
  %v1427 = vpack.c.b16 %v1409, %v1408
  %v1428 = vpack.c.b16 %v1411, %v1410
  %v1429 = vpack.c.b16 %v1413, %v1412
  %1446 = vmatprep.subr.bf16.mxu0 0
  %1447 = vmatpush1.bf16.msra.mxu0 %v1421
  %1448 = vmatprep.subr.bf16.mxu0 0
  %1449 = vmatpush1.bf16.msra.mxu0 %v1420
  %1450 = vmatprep.subr.bf16.mxu0 0
  %1451 = vmatpush1.bf16.msra.mxu0 %v1419
  %1452 = vmatprep.subr.bf16.mxu0 0
  %1453 = vmatpush1.bf16.msra.mxu0 %v1418
  %1454 = vmatprep.subr.bf16.mxu0 0
  %1455 = vmatpush1.bf16.msra.mxu0 %v1417
  %1456 = vmatprep.subr.bf16.mxu0 0
  %1457 = vmatpush1.bf16.msra.mxu0 %v1416
  %1458 = vmatprep.subr.bf16.mxu0 0
  %1459 = vmatpush1.bf16.msra.mxu0 %v1415
  %1460 = vmatprep.subr.bf16.mxu0 0
  %1461 = vmatpush1.bf16.msra.mxu0 %v1414
  %1462 = vmatprep.subr.bf16.mxu0 0
  %1463 = vmatpush2.bf16.msra.mxu0 %v1429
  %1464 = vmatprep.subr.bf16.mxu0 0
  %1465 = vmatpush2.bf16.msra.mxu0 %v1428
  %1466 = vmatprep.subr.bf16.mxu0 0
  %1467 = vmatpush2.bf16.msra.mxu0 %v1427
  %1468 = vmatprep.subr.bf16.mxu0 0
  %1469 = vmatpush2.bf16.msra.mxu0 %v1426
  %1470 = vmatprep.subr.bf16.mxu0 0
  %1471 = vmatpush2.bf16.msra.mxu0 %v1425
  %1472 = vmatprep.subr.bf16.mxu0 0
  %1473 = vmatpush2.bf16.msra.mxu0 %v1424
  %1474 = vmatprep.subr.bf16.mxu0 0
  %1475 = vmatpush2.bf16.msra.mxu0 %v1423
  %1476 = vmatprep.subr.bf16.mxu0 0
  %1477 = vmatpush2.bf16.msra.mxu0 %v1422
  %1478 = vmatprep.mubr.bf16.mxu0 %v1134
  %1479 = vmatmul.mubr.bf16.gmra.mxu0 %v1133
  %v1480 = vpop.f32.mrf.mxu0
  %v1481 = vadd.f32 %v1348, %v1480
  %v1482 = vpop.f32.mrf.mxu0
  %v1483 = vpop.f32.mrf.mxu0
  %v1484 = vadd.f32 %v1348, %v1483
  %v1485 = vpop.f32.mrf.mxu0
  %1486 = vdwg.mxu0
  %1487 = vst [vmem:[%s17] sm:$0xff] %v1305
  %1488 = vst [vmem:[%s17 + $0x8] sm:$0xff] %v1308
  %1489 = vst [vmem:[%s18] sm:$0xff] %v1481
  %1490 = vst [vmem:[%s18 + $0x8] sm:$0xff] %v1484
  %v1491 = vmul.f32 %v1481, 0.5
  %v1492 = vmul.f32 %v1484, 0.5
  %v1493 = vmul.f32 %v1491, 1.442695
  %v1494 = vpow.pop %v1493
  %v1495 = vmul.f32 %v1492, 1.442695
  %v1496 = vpow.pop %v1495
  %v1497 = vld [vmem:[%s1] sm:$0xff]
  %v1498 = vld [vmem:[%s1 + $0x8] sm:$0xff]
  %v1499 = vmul.f32 %v1494, %v1497
  %v1500 = vmul.f32 %v1496, %v1498
  %v1501 = vadd.f32 %v1305, %v1499
  %v1502 = vadd.f32 %v1308, %v1500
  %v1503 = vpack.c.bf16 %v1502, %v1501
  %v1504 = vld [vmem:[%s10] sm:$0xff]
  %v1505 = vld [vmem:[%s10 + $0x8] sm:$0xff]
  %v1506 = vld [vmem:[%s10 + $0x10] sm:$0xff]
  %v1507 = vld [vmem:[%s10 + $0x18] sm:$0xff]
  %v1508 = vld [vmem:[%s10 + $0x20] sm:$0xff]
  %v1509 = vld [vmem:[%s10 + $0x28] sm:$0xff]
  %v1510 = vld [vmem:[%s10 + $0x30] sm:$0xff]
  %v1511 = vld [vmem:[%s10 + $0x38] sm:$0xff]
  %v1512 = vld [vmem:[%s10 + $0x40] sm:$0xff]
  %v1513 = vld [vmem:[%s10 + $0x48] sm:$0xff]
  %v1514 = vld [vmem:[%s10 + $0x50] sm:$0xff]
  %v1515 = vld [vmem:[%s10 + $0x58] sm:$0xff]
  %v1516 = vld [vmem:[%s10 + $0x60] sm:$0xff]
  %v1517 = vld [vmem:[%s10 + $0x68] sm:$0xff]
  %v1518 = vld [vmem:[%s10 + $0x70] sm:$0xff]
  %v1519 = vld [vmem:[%s10 + $0x78] sm:$0xff]
  %v1520 = vld [vmem:[%s11] sm:$0x3]
  %v1522 = vlaneseq
  %v1523 = vshrl.u32 %v1522, 7
  %v1524 = vsub.s32 0, %v1523
  %v1525 = vrot.slane %v1520, %v1524
  %v1526 = vlaneseq
  %v1527 = vshrl.u32 %v1526, 7
  %v1528 = vsub.s32 1, %v1527
  %v1529 = vrot.slane %v1520, %v1528
  %v1548 = vunpack.c.l.b16 %v1504
  %v1549 = vunpack.c.h.b16 %v1504
  %v1550 = vunpack.c.l.b16 %v1505
  %v1551 = vunpack.c.h.b16 %v1505
  %v1552 = vunpack.c.l.b16 %v1506
  %v1553 = vunpack.c.h.b16 %v1506
  %v1554 = vunpack.c.l.b16 %v1507
  %v1555 = vunpack.c.h.b16 %v1507
  %v1556 = vunpack.c.l.b16 %v1508
  %v1557 = vunpack.c.h.b16 %v1508
  %v1558 = vunpack.c.l.b16 %v1509
  %v1559 = vunpack.c.h.b16 %v1509
  %v1560 = vunpack.c.l.b16 %v1510
  %v1561 = vunpack.c.h.b16 %v1510
  %v1562 = vunpack.c.l.b16 %v1511
  %v1563 = vunpack.c.h.b16 %v1511
  %v1564 = vunpack.c.l.b16 %v1512
  %v1565 = vunpack.c.h.b16 %v1512
  %v1566 = vunpack.c.l.b16 %v1513
  %v1567 = vunpack.c.h.b16 %v1513
  %v1568 = vunpack.c.l.b16 %v1514
  %v1569 = vunpack.c.h.b16 %v1514
  %v1570 = vunpack.c.l.b16 %v1515
  %v1571 = vunpack.c.h.b16 %v1515
  %v1572 = vunpack.c.l.b16 %v1516
  %v1573 = vunpack.c.h.b16 %v1516
  %v1574 = vunpack.c.l.b16 %v1517
  %v1575 = vunpack.c.h.b16 %v1517
  %v1576 = vunpack.c.l.b16 %v1518
  %v1577 = vunpack.c.h.b16 %v1518
  %v1578 = vunpack.c.l.b16 %v1519
  %v1579 = vunpack.c.h.b16 %v1519
  %v1580 = vpack.c.b16 %v1550, %v1548
  %v1581 = vpack.c.b16 %v1551, %v1549
  %v1582 = vpack.c.b16 %v1554, %v1552
  %v1583 = vpack.c.b16 %v1555, %v1553
  %v1584 = vpack.c.b16 %v1558, %v1556
  %v1585 = vpack.c.b16 %v1559, %v1557
  %v1586 = vpack.c.b16 %v1562, %v1560
  %v1587 = vpack.c.b16 %v1563, %v1561
  %v1588 = vpack.c.b16 %v1566, %v1564
  %v1589 = vpack.c.b16 %v1567, %v1565
  %v1590 = vpack.c.b16 %v1570, %v1568
  %v1591 = vpack.c.b16 %v1571, %v1569
  %v1592 = vpack.c.b16 %v1574, %v1572
  %v1593 = vpack.c.b16 %v1575, %v1573
  %v1594 = vpack.c.b16 %v1578, %v1576
  %v1595 = vpack.c.b16 %v1579, %v1577
  %1612 = vmatprep.subr.bf16.mxu0 %v1595
  %1613 = vmatpush1.bf16.msra.mxu0 %v1594
  %1614 = vmatprep.subr.bf16.mxu0 %v1593
  %1615 = vmatpush1.bf16.msra.mxu0 %v1592
  %1616 = vmatprep.subr.bf16.mxu0 %v1591
  %1617 = vmatpush1.bf16.msra.mxu0 %v1590
  %1618 = vmatprep.subr.bf16.mxu0 %v1589
  %1619 = vmatpush1.bf16.msra.mxu0 %v1588
  %1620 = vmatprep.subr.bf16.mxu0 %v1587
  %1621 = vmatpush1.bf16.msra.mxu0 %v1586
  %1622 = vmatprep.subr.bf16.mxu0 %v1585
  %1623 = vmatpush1.bf16.msra.mxu0 %v1584
  %1624 = vmatprep.subr.bf16.mxu0 %v1583
  %1625 = vmatpush1.bf16.msra.mxu0 %v1582
  %1626 = vmatprep.subr.bf16.mxu0 %v1581
  %1627 = vmatpush1.bf16.msra.mxu0 %v1580
  %1628 = vmatprep.subr.bf16.mxu0 0
  %1629 = vmatpush2.bf16.msra.mxu0 0
  %1630 = vmatprep.subr.bf16.mxu0 0
  %1631 = vmatpush2.bf16.msra.mxu0 0
  %1632 = vmatprep.subr.bf16.mxu0 0
  %1633 = vmatpush2.bf16.msra.mxu0 0
  %1634 = vmatprep.subr.bf16.mxu0 0
  %1635 = vmatpush2.bf16.msra.mxu0 0
  %1636 = vmatprep.subr.bf16.mxu0 0
  %1637 = vmatpush2.bf16.msra.mxu0 0
  %1638 = vmatprep.subr.bf16.mxu0 0
  %1639 = vmatpush2.bf16.msra.mxu0 0
  %1640 = vmatprep.subr.bf16.mxu0 0
  %1641 = vmatpush2.bf16.msra.mxu0 0
  %1642 = vmatprep.subr.bf16.mxu0 0
  %1643 = vmatpush2.bf16.msra.mxu0 0
  %1644 = vmatprep.mubr.bf16.mxu0 0
  %1645 = vmatmul.mubr.bf16.gmra.mxu0 %v1503
  %v1646 = vpop.f32.mrf.mxu0
  %v1647 = vadd.f32 %v1525, %v1646
  %v1648 = vpop.f32.mrf.mxu0
  %v1649 = vadd.f32 %v1529, %v1648
  %v1650 = vpop.f32.mrf.mxu0
  %v1651 = vadd.f32 %v1525, %v1650
  %v1652 = vpop.f32.mrf.mxu0
  %v1653 = vadd.f32 %v1529, %v1652
  %1654 = vdwg.mxu0
  %v1655 = vmax.f32 %v1647, 0.0
  %v1656 = vmax.f32 %v1649, 0.0
  %v1657 = vmax.f32 %v1651, 0.0
  %v1658 = vmax.f32 %v1653, 0.0
  %v1659 = vpack.c.bf16 %v1657, %v1655
  %v1660 = vpack.c.bf16 %v1658, %v1656
  %v1661 = vld [vmem:[%s12] sm:$0xff]
  %v1662 = vld [vmem:[%s12 + $0x8] sm:$0xff]
  %v1663 = vld [vmem:[%s12 + $0x10] sm:$0xff]
  %v1664 = vld [vmem:[%s12 + $0x18] sm:$0xff]
  %v1665 = vld [vmem:[%s12 + $0x20] sm:$0xff]
  %v1666 = vld [vmem:[%s12 + $0x28] sm:$0xff]
  %v1667 = vld [vmem:[%s12 + $0x30] sm:$0xff]
  %v1668 = vld [vmem:[%s12 + $0x38] sm:$0xff]
  %v1669 = vld [vmem:[%s12 + $0x40] sm:$0xff]
  %v1670 = vld [vmem:[%s12 + $0x48] sm:$0xff]
  %v1671 = vld [vmem:[%s12 + $0x50] sm:$0xff]
  %v1672 = vld [vmem:[%s12 + $0x58] sm:$0xff]
  %v1673 = vld [vmem:[%s12 + $0x60] sm:$0xff]
  %v1674 = vld [vmem:[%s12 + $0x68] sm:$0xff]
  %v1675 = vld [vmem:[%s12 + $0x70] sm:$0xff]
  %v1676 = vld [vmem:[%s12 + $0x78] sm:$0xff]
  %v1677 = vld [vmem:[%s12 + $0x80] sm:$0xff]
  %v1678 = vld [vmem:[%s12 + $0x88] sm:$0xff]
  %v1679 = vld [vmem:[%s12 + $0x90] sm:$0xff]
  %v1680 = vld [vmem:[%s12 + $0x98] sm:$0xff]
  %v1681 = vld [vmem:[%s12 + $0xa0] sm:$0xff]
  %v1682 = vld [vmem:[%s12 + $0xa8] sm:$0xff]
  %v1683 = vld [vmem:[%s12 + $0xb0] sm:$0xff]
  %v1684 = vld [vmem:[%s12 + $0xb8] sm:$0xff]
  %v1685 = vld [vmem:[%s12 + $0xc0] sm:$0xff]
  %v1686 = vld [vmem:[%s12 + $0xc8] sm:$0xff]
  %v1687 = vld [vmem:[%s12 + $0xd0] sm:$0xff]
  %v1688 = vld [vmem:[%s12 + $0xd8] sm:$0xff]
  %v1689 = vld [vmem:[%s12 + $0xe0] sm:$0xff]
  %v1690 = vld [vmem:[%s12 + $0xe8] sm:$0xff]
  %v1691 = vld [vmem:[%s12 + $0xf0] sm:$0xff]
  %v1692 = vld [vmem:[%s12 + $0xf8] sm:$0xff]
  %v1693 = vld [vmem:[%s13] sm:$0x3]
  %v1695 = vlaneseq
  %v1696 = vshrl.u32 %v1695, 7
  %v1697 = vsub.s32 0, %v1696
  %v1698 = vrot.slane %v1693, %v1697
  %v1699 = vlaneseq
  %v1700 = vshrl.u32 %v1699, 7
  %v1701 = vsub.s32 1, %v1700
  %v1702 = vrot.slane %v1693, %v1701
  %v1737 = vunpack.c.l.b16 %v1661
  %v1738 = vunpack.c.h.b16 %v1661
  %v1739 = vunpack.c.l.b16 %v1662
  %v1740 = vunpack.c.h.b16 %v1662
  %v1741 = vunpack.c.l.b16 %v1663
  %v1742 = vunpack.c.h.b16 %v1663
  %v1743 = vunpack.c.l.b16 %v1664
  %v1744 = vunpack.c.h.b16 %v1664
  %v1745 = vunpack.c.l.b16 %v1665
  %v1746 = vunpack.c.h.b16 %v1665
  %v1747 = vunpack.c.l.b16 %v1666
  %v1748 = vunpack.c.h.b16 %v1666
  %v1749 = vunpack.c.l.b16 %v1667
  %v1750 = vunpack.c.h.b16 %v1667
  %v1751 = vunpack.c.l.b16 %v1668
  %v1752 = vunpack.c.h.b16 %v1668
  %v1753 = vunpack.c.l.b16 %v1669
  %v1754 = vunpack.c.h.b16 %v1669
  %v1755 = vunpack.c.l.b16 %v1670
  %v1756 = vunpack.c.h.b16 %v1670
  %v1757 = vunpack.c.l.b16 %v1671
  %v1758 = vunpack.c.h.b16 %v1671
  %v1759 = vunpack.c.l.b16 %v1672
  %v1760 = vunpack.c.h.b16 %v1672
  %v1761 = vunpack.c.l.b16 %v1673
  %v1762 = vunpack.c.h.b16 %v1673
  %v1763 = vunpack.c.l.b16 %v1674
  %v1764 = vunpack.c.h.b16 %v1674
  %v1765 = vunpack.c.l.b16 %v1675
  %v1766 = vunpack.c.h.b16 %v1675
  %v1767 = vunpack.c.l.b16 %v1676
  %v1768 = vunpack.c.h.b16 %v1676
  %v1769 = vunpack.c.l.b16 %v1677
  %v1770 = vunpack.c.h.b16 %v1677
  %v1771 = vunpack.c.l.b16 %v1678
  %v1772 = vunpack.c.h.b16 %v1678
  %v1773 = vunpack.c.l.b16 %v1679
  %v1774 = vunpack.c.h.b16 %v1679
  %v1775 = vunpack.c.l.b16 %v1680
  %v1776 = vunpack.c.h.b16 %v1680
  %v1777 = vunpack.c.l.b16 %v1681
  %v1778 = vunpack.c.h.b16 %v1681
  %v1779 = vunpack.c.l.b16 %v1682
  %v1780 = vunpack.c.h.b16 %v1682
  %v1781 = vunpack.c.l.b16 %v1683
  %v1782 = vunpack.c.h.b16 %v1683
  %v1783 = vunpack.c.l.b16 %v1684
  %v1784 = vunpack.c.h.b16 %v1684
  %v1785 = vunpack.c.l.b16 %v1685
  %v1786 = vunpack.c.h.b16 %v1685
  %v1787 = vunpack.c.l.b16 %v1686
  %v1788 = vunpack.c.h.b16 %v1686
  %v1789 = vunpack.c.l.b16 %v1687
  %v1790 = vunpack.c.h.b16 %v1687
  %v1791 = vunpack.c.l.b16 %v1688
  %v1792 = vunpack.c.h.b16 %v1688
  %v1793 = vunpack.c.l.b16 %v1689
  %v1794 = vunpack.c.h.b16 %v1689
  %v1795 = vunpack.c.l.b16 %v1690
  %v1796 = vunpack.c.h.b16 %v1690
  %v1797 = vunpack.c.l.b16 %v1691
  %v1798 = vunpack.c.h.b16 %v1691
  %v1799 = vunpack.c.l.b16 %v1692
  %v1800 = vunpack.c.h.b16 %v1692
  %v1801 = vpack.c.b16 %v1739, %v1737
  %v1802 = vpack.c.b16 %v1740, %v1738
  %v1803 = vpack.c.b16 %v1743, %v1741
  %v1804 = vpack.c.b16 %v1744, %v1742
  %v1805 = vpack.c.b16 %v1747, %v1745
  %v1806 = vpack.c.b16 %v1748, %v1746
  %v1807 = vpack.c.b16 %v1751, %v1749
  %v1808 = vpack.c.b16 %v1752, %v1750
  %v1809 = vpack.c.b16 %v1755, %v1753
  %v1810 = vpack.c.b16 %v1756, %v1754
  %v1811 = vpack.c.b16 %v1759, %v1757
  %v1812 = vpack.c.b16 %v1760, %v1758
  %v1813 = vpack.c.b16 %v1763, %v1761
  %v1814 = vpack.c.b16 %v1764, %v1762
  %v1815 = vpack.c.b16 %v1767, %v1765
  %v1816 = vpack.c.b16 %v1768, %v1766
  %v1817 = vpack.c.b16 %v1771, %v1769
  %v1818 = vpack.c.b16 %v1772, %v1770
  %v1819 = vpack.c.b16 %v1775, %v1773
  %v1820 = vpack.c.b16 %v1776, %v1774
  %v1821 = vpack.c.b16 %v1779, %v1777
  %v1822 = vpack.c.b16 %v1780, %v1778
  %v1823 = vpack.c.b16 %v1783, %v1781
  %v1824 = vpack.c.b16 %v1784, %v1782
  %v1825 = vpack.c.b16 %v1787, %v1785
  %v1826 = vpack.c.b16 %v1788, %v1786
  %v1827 = vpack.c.b16 %v1791, %v1789
  %v1828 = vpack.c.b16 %v1792, %v1790
  %v1829 = vpack.c.b16 %v1795, %v1793
  %v1830 = vpack.c.b16 %v1796, %v1794
  %v1831 = vpack.c.b16 %v1799, %v1797
  %v1832 = vpack.c.b16 %v1800, %v1798
  %1865 = vmatprep.subr.bf16.mxu0 %v1816
  %1866 = vmatpush1.bf16.msra.mxu0 %v1815
  %1867 = vmatprep.subr.bf16.mxu0 %v1814
  %1868 = vmatpush1.bf16.msra.mxu0 %v1813
  %1869 = vmatprep.subr.bf16.mxu0 %v1812
  %1870 = vmatpush1.bf16.msra.mxu0 %v1811
  %1871 = vmatprep.subr.bf16.mxu0 %v1810
  %1872 = vmatpush1.bf16.msra.mxu0 %v1809
  %1873 = vmatprep.subr.bf16.mxu0 %v1808
  %1874 = vmatpush1.bf16.msra.mxu0 %v1807
  %1875 = vmatprep.subr.bf16.mxu0 %v1806
  %1876 = vmatpush1.bf16.msra.mxu0 %v1805
  %1877 = vmatprep.subr.bf16.mxu0 %v1804
  %1878 = vmatpush1.bf16.msra.mxu0 %v1803
  %1879 = vmatprep.subr.bf16.mxu0 %v1802
  %1880 = vmatpush1.bf16.msra.mxu0 %v1801
  %1881 = vmatprep.subr.bf16.mxu0 %v1832
  %1882 = vmatpush2.bf16.msra.mxu0 %v1831
  %1883 = vmatprep.subr.bf16.mxu0 %v1830
  %1884 = vmatpush2.bf16.msra.mxu0 %v1829
  %1885 = vmatprep.subr.bf16.mxu0 %v1828
  %1886 = vmatpush2.bf16.msra.mxu0 %v1827
  %1887 = vmatprep.subr.bf16.mxu0 %v1826
  %1888 = vmatpush2.bf16.msra.mxu0 %v1825
  %1889 = vmatprep.subr.bf16.mxu0 %v1824
  %1890 = vmatpush2.bf16.msra.mxu0 %v1823
  %1891 = vmatprep.subr.bf16.mxu0 %v1822
  %1892 = vmatpush2.bf16.msra.mxu0 %v1821
  %1893 = vmatprep.subr.bf16.mxu0 %v1820
  %1894 = vmatpush2.bf16.msra.mxu0 %v1819
  %1895 = vmatprep.subr.bf16.mxu0 %v1818
  %1896 = vmatpush2.bf16.msra.mxu0 %v1817
  %1897 = vmatprep.mubr.bf16.mxu0 %v1660
  %1898 = vmatmul.mubr.bf16.gmra.mxu0 %v1659
  %v1899 = vpop.f32.mrf.mxu0
  %v1900 = vadd.f32 %v1698, %v1899
  %v1901 = vpop.f32.mrf.mxu0
  %v1902 = vadd.f32 %v1702, %v1901
  %v1903 = vpop.f32.mrf.mxu0
  %v1904 = vadd.f32 %v1698, %v1903
  %v1905 = vpop.f32.mrf.mxu0
  %v1906 = vadd.f32 %v1702, %v1905
  %1907 = vdwg.mxu0
  %v1908 = vmax.f32 %v1900, 0.0
  %v1909 = vmax.f32 %v1902, 0.0
  %v1910 = vmax.f32 %v1904, 0.0
  %v1911 = vmax.f32 %v1906, 0.0
  %v1912 = vpack.c.bf16 %v1910, %v1908
  %v1913 = vpack.c.bf16 %v1911, %v1909
  %v1914 = vld [vmem:[%s14] sm:$0xff]
  %v1915 = vld [vmem:[%s14 + $0x8] sm:$0xff]
  %v1916 = vld [vmem:[%s14 + $0x10] sm:$0xff]
  %v1917 = vld [vmem:[%s14 + $0x18] sm:$0xf]
  %v1918 = vld [vmem:[%s14 + $0x1c] sm:$0xff]
  %v1919 = vld [vmem:[%s14 + $0x24] sm:$0xff]
  %v1920 = vld [vmem:[%s14 + $0x2c] sm:$0xff]
  %v1921 = vld [vmem:[%s14 + $0x34] sm:$0xf]
  %v1922 = vld [vmem:[%s14 + $0x38] sm:$0xff]
  %v1923 = vld [vmem:[%s14 + $0x40] sm:$0xff]
  %v1924 = vld [vmem:[%s14 + $0x48] sm:$0xff]
  %v1925 = vld [vmem:[%s14 + $0x50] sm:$0xf]
  %v1926 = vld [vmem:[%s14 + $0x54] sm:$0xff]
  %v1927 = vld [vmem:[%s14 + $0x5c] sm:$0xff]
  %v1928 = vld [vmem:[%s14 + $0x64] sm:$0xff]
  %v1929 = vld [vmem:[%s14 + $0x6c] sm:$0xf]
  %v1930 = vld [vmem:[%s14 + $0x70] sm:$0xff]
  %v1931 = vld [vmem:[%s14 + $0x78] sm:$0xff]
  %v1932 = vld [vmem:[%s14 + $0x80] sm:$0xff]
  %v1933 = vld [vmem:[%s14 + $0x88] sm:$0xf]
  %v1934 = vld [vmem:[%s14 + $0x8c] sm:$0xff]
  %v1935 = vld [vmem:[%s14 + $0x94] sm:$0xff]
  %v1936 = vld [vmem:[%s14 + $0x9c] sm:$0xff]
  %v1937 = vld [vmem:[%s14 + $0xa4] sm:$0xf]
  %v1938 = vld [vmem:[%s14 + $0xa8] sm:$0xff]
  %v1939 = vld [vmem:[%s14 + $0xb0] sm:$0xff]
  %v1940 = vld [vmem:[%s14 + $0xb8] sm:$0xff]
  %v1941 = vld [vmem:[%s14 + $0xc0] sm:$0xf]
  %v1942 = vld [vmem:[%s14 + $0xc4] sm:$0xff]
  %v1943 = vld [vmem:[%s14 + $0xcc] sm:$0xff]
  %v1944 = vld [vmem:[%s14 + $0xd4] sm:$0xff]
  %v1945 = vld [vmem:[%s14 + $0xdc] sm:$0xf]
  %v1946 = vld [vmem:[%s14 + $0xe0] sm:$0xff]
  %v1947 = vld [vmem:[%s14 + $0xe8] sm:$0xff]
  %v1948 = vld [vmem:[%s14 + $0xf0] sm:$0xff]
  %v1949 = vld [vmem:[%s14 + $0xf8] sm:$0xf]
  %v1950 = vld [vmem:[%s14 + $0xfc] sm:$0xff]
  %v1951 = vld [vmem:[%s14 + $0x104] sm:$0xff]
  %v1952 = vld [vmem:[%s14 + $0x10c] sm:$0xff]
  %v1953 = vld [vmem:[%s14 + $0x114] sm:$0xf]
  %v1954 = vld [vmem:[%s14 + $0x118] sm:$0xff]
  %v1955 = vld [vmem:[%s14 + $0x120] sm:$0xff]
  %v1956 = vld [vmem:[%s14 + $0x128] sm:$0xff]
  %v1957 = vld [vmem:[%s14 + $0x130] sm:$0xf]
  %v1958 = vld [vmem:[%s14 + $0x134] sm:$0xff]
  %v1959 = vld [vmem:[%s14 + $0x13c] sm:$0xff]
  %v1960 = vld [vmem:[%s14 + $0x144] sm:$0xff]
  %v1961 = vld [vmem:[%s14 + $0x14c] sm:$0xf]
  %v1962 = vld [vmem:[%s14 + $0x150] sm:$0xff]
  %v1963 = vld [vmem:[%s14 + $0x158] sm:$0xff]
  %v1964 = vld [vmem:[%s14 + $0x160] sm:$0xff]
  %v1965 = vld [vmem:[%s14 + $0x168] sm:$0xf]
  %v1966 = vld [vmem:[%s14 + $0x16c] sm:$0xff]
  %v1967 = vld [vmem:[%s14 + $0x174] sm:$0xff]
  %v1968 = vld [vmem:[%s14 + $0x17c] sm:$0xff]
  %v1969 = vld [vmem:[%s14 + $0x184] sm:$0xf]
  %v1970 = vld [vmem:[%s14 + $0x188] sm:$0xff]
  %v1971 = vld [vmem:[%s14 + $0x190] sm:$0xff]
  %v1972 = vld [vmem:[%s14 + $0x198] sm:$0xff]
  %v1973 = vld [vmem:[%s14 + $0x1a0] sm:$0xf]
  %v1974 = vld [vmem:[%s14 + $0x1a4] sm:$0xff]
  %v1975 = vld [vmem:[%s14 + $0x1ac] sm:$0xff]
  %v1976 = vld [vmem:[%s14 + $0x1b4] sm:$0xff]
  %v1977 = vld [vmem:[%s14 + $0x1bc] sm:$0xf]
  %v1978 = vld [vmem:[%s14 + $0x1c0] sm:$0xff]
  %v1979 = vld [vmem:[%s14 + $0x1c8] sm:$0xff]
  %v1980 = vld [vmem:[%s14 + $0x1d0] sm:$0xff]
  %v1981 = vld [vmem:[%s14 + $0x1d8] sm:$0xf]
  %v1982 = vld [vmem:[%s14 + $0x1dc] sm:$0xff]
  %v1983 = vld [vmem:[%s14 + $0x1e4] sm:$0xff]
  %v1984 = vld [vmem:[%s14 + $0x1ec] sm:$0xff]
  %v1985 = vld [vmem:[%s14 + $0x1f4] sm:$0xf]
  %v1986 = vld [vmem:[%s14 + $0x1f8] sm:$0xff]
  %v1987 = vld [vmem:[%s14 + $0x200] sm:$0xff]
  %v1988 = vld [vmem:[%s14 + $0x208] sm:$0xff]
  %v1989 = vld [vmem:[%s14 + $0x210] sm:$0xf]
  %v1990 = vld [vmem:[%s14 + $0x214] sm:$0xff]
  %v1991 = vld [vmem:[%s14 + $0x21c] sm:$0xff]
  %v1992 = vld [vmem:[%s14 + $0x224] sm:$0xff]
  %v1993 = vld [vmem:[%s14 + $0x22c] sm:$0xf]
  %v1994 = vld [vmem:[%s14 + $0x230] sm:$0xff]
  %v1995 = vld [vmem:[%s14 + $0x238] sm:$0xff]
  %v1996 = vld [vmem:[%s14 + $0x240] sm:$0xff]
  %v1997 = vld [vmem:[%s14 + $0x248] sm:$0xf]
  %v1998 = vld [vmem:[%s14 + $0x24c] sm:$0xff]
  %v1999 = vld [vmem:[%s14 + $0x254] sm:$0xff]
  %v2000 = vld [vmem:[%s14 + $0x25c] sm:$0xff]
  %v2001 = vld [vmem:[%s14 + $0x264] sm:$0xf]
  %v2002 = vld [vmem:[%s14 + $0x268] sm:$0xff]
  %v2003 = vld [vmem:[%s14 + $0x270] sm:$0xff]
  %v2004 = vld [vmem:[%s14 + $0x278] sm:$0xff]
  %v2005 = vld [vmem:[%s14 + $0x280] sm:$0xf]
  %v2006 = vld [vmem:[%s14 + $0x284] sm:$0xff]
  %v2007 = vld [vmem:[%s14 + $0x28c] sm:$0xff]
  %v2008 = vld [vmem:[%s14 + $0x294] sm:$0xff]
  %v2009 = vld [vmem:[%s14 + $0x29c] sm:$0xf]
  %v2010 = vld [vmem:[%s14 + $0x2a0] sm:$0xff]
  %v2011 = vld [vmem:[%s14 + $0x2a8] sm:$0xff]
  %v2012 = vld [vmem:[%s14 + $0x2b0] sm:$0xff]
  %v2013 = vld [vmem:[%s14 + $0x2b8] sm:$0xf]
  %v2014 = vld [vmem:[%s14 + $0x2bc] sm:$0xff]
  %v2015 = vld [vmem:[%s14 + $0x2c4] sm:$0xff]
  %v2016 = vld [vmem:[%s14 + $0x2cc] sm:$0xff]
  %v2017 = vld [vmem:[%s14 + $0x2d4] sm:$0xf]
  %v2018 = vld [vmem:[%s14 + $0x2d8] sm:$0xff]
  %v2019 = vld [vmem:[%s14 + $0x2e0] sm:$0xff]
  %v2020 = vld [vmem:[%s14 + $0x2e8] sm:$0xff]
  %v2021 = vld [vmem:[%s14 + $0x2f0] sm:$0xf]
  %v2022 = vld [vmem:[%s14 + $0x2f4] sm:$0xff]
  %v2023 = vld [vmem:[%s14 + $0x2fc] sm:$0xff]
  %v2024 = vld [vmem:[%s14 + $0x304] sm:$0xff]
  %v2025 = vld [vmem:[%s14 + $0x30c] sm:$0xf]
  %v2026 = vld [vmem:[%s14 + $0x310] sm:$0xff]
  %v2027 = vld [vmem:[%s14 + $0x318] sm:$0xff]
  %v2028 = vld [vmem:[%s14 + $0x320] sm:$0xff]
  %v2029 = vld [vmem:[%s14 + $0x328] sm:$0xf]
  %v2030 = vld [vmem:[%s14 + $0x32c] sm:$0xff]
  %v2031 = vld [vmem:[%s14 + $0x334] sm:$0xff]
  %v2032 = vld [vmem:[%s14 + $0x33c] sm:$0xff]
  %v2033 = vld [vmem:[%s14 + $0x344] sm:$0xf]
  %v2034 = vld [vmem:[%s14 + $0x348] sm:$0xff]
  %v2035 = vld [vmem:[%s14 + $0x350] sm:$0xff]
  %v2036 = vld [vmem:[%s14 + $0x358] sm:$0xff]
  %v2037 = vld [vmem:[%s14 + $0x360] sm:$0xf]
  %v2038 = vld [vmem:[%s14 + $0x364] sm:$0xff]
  %v2039 = vld [vmem:[%s14 + $0x36c] sm:$0xff]
  %v2040 = vld [vmem:[%s14 + $0x374] sm:$0xff]
  %v2041 = vld [vmem:[%s14 + $0x37c] sm:$0xf]
  %v2042 = vld [vmem:[%s15] sm:$0x7f]
  %v2044 = vlaneseq
  %v2045 = vshrl.u32 %v2044, 7
  %v2046 = vsub.s32 0, %v2045
  %v2047 = vrot.slane %v2042, %v2046
  %v2048 = vlaneseq
  %v2049 = vshrl.u32 %v2048, 7
  %v2050 = vsub.s32 1, %v2049
  %v2051 = vrot.slane %v2042, %v2050
  %v2052 = vlaneseq
  %v2053 = vshrl.u32 %v2052, 7
  %v2054 = vsub.s32 2, %v2053
  %v2055 = vrot.slane %v2042, %v2054
  %v2056 = vlaneseq
  %v2057 = vshrl.u32 %v2056, 7
  %v2058 = vsub.s32 3, %v2057
  %v2059 = vrot.slane %v2042, %v2058
  %v2060 = vlaneseq
  %v2061 = vshrl.u32 %v2060, 7
  %v2062 = vsub.s32 4, %v2061
  %v2063 = vrot.slane %v2042, %v2062
  %v2064 = vlaneseq
  %v2065 = vshrl.u32 %v2064, 7
  %v2066 = vsub.s32 5, %v2065
  %v2067 = vrot.slane %v2042, %v2066
  %v2068 = vlaneseq
  %v2069 = vshrl.u32 %v2068, 7
  %v2070 = vsub.s32 6, %v2069
  %v2071 = vrot.slane %v2042, %v2070
  %v2207 = vunpack.c.l.b16 %v1914
  %v2208 = vunpack.c.h.b16 %v1914
  %v2209 = vunpack.c.l.b16 %v1915
  %v2210 = vunpack.c.h.b16 %v1915
  %v2211 = vunpack.c.l.b16 %v1916
  %v2212 = vunpack.c.h.b16 %v1916
  %v2213 = vunpack.c.l.b16 %v1917
  %v2214 = vunpack.c.l.b16 %v1918
  %v2215 = vunpack.c.h.b16 %v1918
  %v2216 = vunpack.c.l.b16 %v1919
  %v2217 = vunpack.c.h.b16 %v1919
  %v2218 = vunpack.c.l.b16 %v1920
  %v2219 = vunpack.c.h.b16 %v1920
  %v2220 = vunpack.c.l.b16 %v1921
  %v2221 = vunpack.c.l.b16 %v1922
  %v2222 = vunpack.c.h.b16 %v1922
  %v2223 = vunpack.c.l.b16 %v1923
  %v2224 = vunpack.c.h.b16 %v1923
  %v2225 = vunpack.c.l.b16 %v1924
  %v2226 = vunpack.c.h.b16 %v1924
  %v2227 = vunpack.c.l.b16 %v1925
  %v2228 = vunpack.c.l.b16 %v1926
  %v2229 = vunpack.c.h.b16 %v1926
  %v2230 = vunpack.c.l.b16 %v1927
  %v2231 = vunpack.c.h.b16 %v1927
  %v2232 = vunpack.c.l.b16 %v1928
  %v2233 = vunpack.c.h.b16 %v1928
  %v2234 = vunpack.c.l.b16 %v1929
  %v2235 = vunpack.c.l.b16 %v1930
  %v2236 = vunpack.c.h.b16 %v1930
  %v2237 = vunpack.c.l.b16 %v1931
  %v2238 = vunpack.c.h.b16 %v1931
  %v2239 = vunpack.c.l.b16 %v1932
  %v2240 = vunpack.c.h.b16 %v1932
  %v2241 = vunpack.c.l.b16 %v1933
  %v2242 = vunpack.c.l.b16 %v1934
  %v2243 = vunpack.c.h.b16 %v1934
  %v2244 = vunpack.c.l.b16 %v1935
  %v2245 = vunpack.c.h.b16 %v1935
  %v2246 = vunpack.c.l.b16 %v1936
  %v2247 = vunpack.c.h.b16 %v1936
  %v2248 = vunpack.c.l.b16 %v1937
  %v2249 = vunpack.c.l.b16 %v1938
  %v2250 = vunpack.c.h.b16 %v1938
  %v2251 = vunpack.c.l.b16 %v1939
  %v2252 = vunpack.c.h.b16 %v1939
  %v2253 = vunpack.c.l.b16 %v1940
  %v2254 = vunpack.c.h.b16 %v1940
  %v2255 = vunpack.c.l.b16 %v1941
  %v2256 = vunpack.c.l.b16 %v1942
  %v2257 = vunpack.c.h.b16 %v1942
  %v2258 = vunpack.c.l.b16 %v1943
  %v2259 = vunpack.c.h.b16 %v1943
  %v2260 = vunpack.c.l.b16 %v1944
  %v2261 = vunpack.c.h.b16 %v1944
  %v2262 = vunpack.c.l.b16 %v1945
  %v2263 = vunpack.c.l.b16 %v1946
  %v2264 = vunpack.c.h.b16 %v1946
  %v2265 = vunpack.c.l.b16 %v1947
  %v2266 = vunpack.c.h.b16 %v1947
  %v2267 = vunpack.c.l.b16 %v1948
  %v2268 = vunpack.c.h.b16 %v1948
  %v2269 = vunpack.c.l.b16 %v1949
  %v2270 = vunpack.c.l.b16 %v1950
  %v2271 = vunpack.c.h.b16 %v1950
  %v2272 = vunpack.c.l.b16 %v1951
  %v2273 = vunpack.c.h.b16 %v1951
  %v2274 = vunpack.c.l.b16 %v1952
  %v2275 = vunpack.c.h.b16 %v1952
  %v2276 = vunpack.c.l.b16 %v1953
  %v2277 = vunpack.c.l.b16 %v1954
  %v2278 = vunpack.c.h.b16 %v1954
  %v2279 = vunpack.c.l.b16 %v1955
  %v2280 = vunpack.c.h.b16 %v1955
  %v2281 = vunpack.c.l.b16 %v1956
  %v2282 = vunpack.c.h.b16 %v1956
  %v2283 = vunpack.c.l.b16 %v1957
  %v2284 = vunpack.c.l.b16 %v1958
  %v2285 = vunpack.c.h.b16 %v1958
  %v2286 = vunpack.c.l.b16 %v1959
  %v2287 = vunpack.c.h.b16 %v1959
  %v2288 = vunpack.c.l.b16 %v1960
  %v2289 = vunpack.c.h.b16 %v1960
  %v2290 = vunpack.c.l.b16 %v1961
  %v2291 = vunpack.c.l.b16 %v1962
  %v2292 = vunpack.c.h.b16 %v1962
  %v2293 = vunpack.c.l.b16 %v1963
  %v2294 = vunpack.c.h.b16 %v1963
  %v2295 = vunpack.c.l.b16 %v1964
  %v2296 = vunpack.c.h.b16 %v1964
  %v2297 = vunpack.c.l.b16 %v1965
  %v2298 = vunpack.c.l.b16 %v1966
  %v2299 = vunpack.c.h.b16 %v1966
  %v2300 = vunpack.c.l.b16 %v1967
  %v2301 = vunpack.c.h.b16 %v1967
  %v2302 = vunpack.c.l.b16 %v1968
  %v2303 = vunpack.c.h.b16 %v1968
  %v2304 = vunpack.c.l.b16 %v1969
  %v2305 = vunpack.c.l.b16 %v1970
  %v2306 = vunpack.c.h.b16 %v1970
  %v2307 = vunpack.c.l.b16 %v1971
  %v2308 = vunpack.c.h.b16 %v1971
  %v2309 = vunpack.c.l.b16 %v1972
  %v2310 = vunpack.c.h.b16 %v1972
  %v2311 = vunpack.c.l.b16 %v1973
  %v2312 = vunpack.c.l.b16 %v1974
  %v2313 = vunpack.c.h.b16 %v1974
  %v2314 = vunpack.c.l.b16 %v1975
  %v2315 = vunpack.c.h.b16 %v1975
  %v2316 = vunpack.c.l.b16 %v1976
  %v2317 = vunpack.c.h.b16 %v1976
  %v2318 = vunpack.c.l.b16 %v1977
  %v2319 = vunpack.c.l.b16 %v1978
  %v2320 = vunpack.c.h.b16 %v1978
  %v2321 = vunpack.c.l.b16 %v1979
  %v2322 = vunpack.c.h.b16 %v1979
  %v2323 = vunpack.c.l.b16 %v1980
  %v2324 = vunpack.c.h.b16 %v1980
  %v2325 = vunpack.c.l.b16 %v1981
  %v2326 = vunpack.c.l.b16 %v1982
  %v2327 = vunpack.c.h.b16 %v1982
  %v2328 = vunpack.c.l.b16 %v1983
  %v2329 = vunpack.c.h.b16 %v1983
  %v2330 = vunpack.c.l.b16 %v1984
  %v2331 = vunpack.c.h.b16 %v1984
  %v2332 = vunpack.c.l.b16 %v1985
  %v2333 = vunpack.c.l.b16 %v1986
  %v2334 = vunpack.c.h.b16 %v1986
  %v2335 = vunpack.c.l.b16 %v1987
  %v2336 = vunpack.c.h.b16 %v1987
  %v2337 = vunpack.c.l.b16 %v1988
  %v2338 = vunpack.c.h.b16 %v1988
  %v2339 = vunpack.c.l.b16 %v1989
  %v2340 = vunpack.c.l.b16 %v1990
  %v2341 = vunpack.c.h.b16 %v1990
  %v2342 = vunpack.c.l.b16 %v1991
  %v2343 = vunpack.c.h.b16 %v1991
  %v2344 = vunpack.c.l.b16 %v1992
  %v2345 = vunpack.c.h.b16 %v1992
  %v2346 = vunpack.c.l.b16 %v1993
  %v2347 = vunpack.c.l.b16 %v1994
  %v2348 = vunpack.c.h.b16 %v1994
  %v2349 = vunpack.c.l.b16 %v1995
  %v2350 = vunpack.c.h.b16 %v1995
  %v2351 = vunpack.c.l.b16 %v1996
  %v2352 = vunpack.c.h.b16 %v1996
  %v2353 = vunpack.c.l.b16 %v1997
  %v2354 = vunpack.c.l.b16 %v1998
  %v2355 = vunpack.c.h.b16 %v1998
  %v2356 = vunpack.c.l.b16 %v1999
  %v2357 = vunpack.c.h.b16 %v1999
  %v2358 = vunpack.c.l.b16 %v2000
  %v2359 = vunpack.c.h.b16 %v2000
  %v2360 = vunpack.c.l.b16 %v2001
  %v2361 = vunpack.c.l.b16 %v2002
  %v2362 = vunpack.c.h.b16 %v2002
  %v2363 = vunpack.c.l.b16 %v2003
  %v2364 = vunpack.c.h.b16 %v2003
  %v2365 = vunpack.c.l.b16 %v2004
  %v2366 = vunpack.c.h.b16 %v2004
  %v2367 = vunpack.c.l.b16 %v2005
  %v2368 = vunpack.c.l.b16 %v2006
  %v2369 = vunpack.c.h.b16 %v2006
  %v2370 = vunpack.c.l.b16 %v2007
  %v2371 = vunpack.c.h.b16 %v2007
  %v2372 = vunpack.c.l.b16 %v2008
  %v2373 = vunpack.c.h.b16 %v2008
  %v2374 = vunpack.c.l.b16 %v2009
  %v2375 = vunpack.c.l.b16 %v2010
  %v2376 = vunpack.c.h.b16 %v2010
  %v2377 = vunpack.c.l.b16 %v2011
  %v2378 = vunpack.c.h.b16 %v2011
  %v2379 = vunpack.c.l.b16 %v2012
  %v2380 = vunpack.c.h.b16 %v2012
  %v2381 = vunpack.c.l.b16 %v2013
  %v2382 = vunpack.c.l.b16 %v2014
  %v2383 = vunpack.c.h.b16 %v2014
  %v2384 = vunpack.c.l.b16 %v2015
  %v2385 = vunpack.c.h.b16 %v2015
  %v2386 = vunpack.c.l.b16 %v2016
  %v2387 = vunpack.c.h.b16 %v2016
  %v2388 = vunpack.c.l.b16 %v2017
  %v2389 = vunpack.c.l.b16 %v2018
  %v2390 = vunpack.c.h.b16 %v2018
  %v2391 = vunpack.c.l.b16 %v2019
  %v2392 = vunpack.c.h.b16 %v2019
  %v2393 = vunpack.c.l.b16 %v2020
  %v2394 = vunpack.c.h.b16 %v2020
  %v2395 = vunpack.c.l.b16 %v2021
  %v2396 = vunpack.c.l.b16 %v2022
  %v2397 = vunpack.c.h.b16 %v2022
  %v2398 = vunpack.c.l.b16 %v2023
  %v2399 = vunpack.c.h.b16 %v2023
  %v2400 = vunpack.c.l.b16 %v2024
  %v2401 = vunpack.c.h.b16 %v2024
  %v2402 = vunpack.c.l.b16 %v2025
  %v2403 = vunpack.c.l.b16 %v2026
  %v2404 = vunpack.c.h.b16 %v2026
  %v2405 = vunpack.c.l.b16 %v2027
  %v2406 = vunpack.c.h.b16 %v2027
  %v2407 = vunpack.c.l.b16 %v2028
  %v2408 = vunpack.c.h.b16 %v2028
  %v2409 = vunpack.c.l.b16 %v2029
  %v2410 = vunpack.c.l.b16 %v2030
  %v2411 = vunpack.c.h.b16 %v2030
  %v2412 = vunpack.c.l.b16 %v2031
  %v2413 = vunpack.c.h.b16 %v2031
  %v2414 = vunpack.c.l.b16 %v2032
  %v2415 = vunpack.c.h.b16 %v2032
  %v2416 = vunpack.c.l.b16 %v2033
  %v2417 = vunpack.c.l.b16 %v2034
  %v2418 = vunpack.c.h.b16 %v2034
  %v2419 = vunpack.c.l.b16 %v2035
  %v2420 = vunpack.c.h.b16 %v2035
  %v2421 = vunpack.c.l.b16 %v2036
  %v2422 = vunpack.c.h.b16 %v2036
  %v2423 = vunpack.c.l.b16 %v2037
  %v2424 = vunpack.c.l.b16 %v2038
  %v2425 = vunpack.c.h.b16 %v2038
  %v2426 = vunpack.c.l.b16 %v2039
  %v2427 = vunpack.c.h.b16 %v2039
  %v2428 = vunpack.c.l.b16 %v2040
  %v2429 = vunpack.c.h.b16 %v2040
  %v2430 = vunpack.c.l.b16 %v2041
  %v2431 = vpack.c.b16 %v2214, %v2207
  %v2432 = vpack.c.b16 %v2215, %v2208
  %v2433 = vpack.c.b16 %v2216, %v2209
  %v2434 = vpack.c.b16 %v2217, %v2210
  %v2435 = vpack.c.b16 %v2218, %v2211
  %v2436 = vpack.c.b16 %v2219, %v2212
  %v2437 = vpack.c.b16 %v2220, %v2213
  %v2438 = vpack.c.b16 %v2228, %v2221
  %v2439 = vpack.c.b16 %v2229, %v2222
  %v2440 = vpack.c.b16 %v2230, %v2223
  %v2441 = vpack.c.b16 %v2231, %v2224
  %v2442 = vpack.c.b16 %v2232, %v2225
  %v2443 = vpack.c.b16 %v2233, %v2226
  %v2444 = vpack.c.b16 %v2234, %v2227
  %v2445 = vpack.c.b16 %v2242, %v2235
  %v2446 = vpack.c.b16 %v2243, %v2236
  %v2447 = vpack.c.b16 %v2244, %v2237
  %v2448 = vpack.c.b16 %v2245, %v2238
  %v2449 = vpack.c.b16 %v2246, %v2239
  %v2450 = vpack.c.b16 %v2247, %v2240
  %v2451 = vpack.c.b16 %v2248, %v2241
  %v2452 = vpack.c.b16 %v2256, %v2249
  %v2453 = vpack.c.b16 %v2257, %v2250
  %v2454 = vpack.c.b16 %v2258, %v2251
  %v2455 = vpack.c.b16 %v2259, %v2252
  %v2456 = vpack.c.b16 %v2260, %v2253
  %v2457 = vpack.c.b16 %v2261, %v2254
  %v2458 = vpack.c.b16 %v2262, %v2255
  %v2459 = vpack.c.b16 %v2270, %v2263
  %v2460 = vpack.c.b16 %v2271, %v2264
  %v2461 = vpack.c.b16 %v2272, %v2265
  %v2462 = vpack.c.b16 %v2273, %v2266
  %v2463 = vpack.c.b16 %v2274, %v2267
  %v2464 = vpack.c.b16 %v2275, %v2268
  %v2465 = vpack.c.b16 %v2276, %v2269
  %v2466 = vpack.c.b16 %v2284, %v2277
  %v2467 = vpack.c.b16 %v2285, %v2278
  %v2468 = vpack.c.b16 %v2286, %v2279
  %v2469 = vpack.c.b16 %v2287, %v2280
  %v2470 = vpack.c.b16 %v2288, %v2281
  %v2471 = vpack.c.b16 %v2289, %v2282
  %v2472 = vpack.c.b16 %v2290, %v2283
  %v2473 = vpack.c.b16 %v2298, %v2291
  %v2474 = vpack.c.b16 %v2299, %v2292
  %v2475 = vpack.c.b16 %v2300, %v2293
  %v2476 = vpack.c.b16 %v2301, %v2294
  %v2477 = vpack.c.b16 %v2302, %v2295
  %v2478 = vpack.c.b16 %v2303, %v2296
  %v2479 = vpack.c.b16 %v2304, %v2297
  %v2480 = vpack.c.b16 %v2312, %v2305
  %v2481 = vpack.c.b16 %v2313, %v2306
  %v2482 = vpack.c.b16 %v2314, %v2307
  %v2483 = vpack.c.b16 %v2315, %v2308
  %v2484 = vpack.c.b16 %v2316, %v2309
  %v2485 = vpack.c.b16 %v2317, %v2310
  %v2486 = vpack.c.b16 %v2318, %v2311
  %v2487 = vpack.c.b16 %v2326, %v2319
  %v2488 = vpack.c.b16 %v2327, %v2320
  %v2489 = vpack.c.b16 %v2328, %v2321
  %v2490 = vpack.c.b16 %v2329, %v2322
  %v2491 = vpack.c.b16 %v2330, %v2323
  %v2492 = vpack.c.b16 %v2331, %v2324
  %v2493 = vpack.c.b16 %v2332, %v2325
  %v2494 = vpack.c.b16 %v2340, %v2333
  %v2495 = vpack.c.b16 %v2341, %v2334
  %v2496 = vpack.c.b16 %v2342, %v2335
  %v2497 = vpack.c.b16 %v2343, %v2336
  %v2498 = vpack.c.b16 %v2344, %v2337
  %v2499 = vpack.c.b16 %v2345, %v2338
  %v2500 = vpack.c.b16 %v2346, %v2339
  %v2501 = vpack.c.b16 %v2354, %v2347
  %v2502 = vpack.c.b16 %v2355, %v2348
  %v2503 = vpack.c.b16 %v2356, %v2349
  %v2504 = vpack.c.b16 %v2357, %v2350
  %v2505 = vpack.c.b16 %v2358, %v2351
  %v2506 = vpack.c.b16 %v2359, %v2352
  %v2507 = vpack.c.b16 %v2360, %v2353
  %v2508 = vpack.c.b16 %v2368, %v2361
  %v2509 = vpack.c.b16 %v2369, %v2362
  %v2510 = vpack.c.b16 %v2370, %v2363
  %v2511 = vpack.c.b16 %v2371, %v2364
  %v2512 = vpack.c.b16 %v2372, %v2365
  %v2513 = vpack.c.b16 %v2373, %v2366
  %v2514 = vpack.c.b16 %v2374, %v2367
  %v2515 = vpack.c.b16 %v2382, %v2375
  %v2516 = vpack.c.b16 %v2383, %v2376
  %v2517 = vpack.c.b16 %v2384, %v2377
  %v2518 = vpack.c.b16 %v2385, %v2378
  %v2519 = vpack.c.b16 %v2386, %v2379
  %v2520 = vpack.c.b16 %v2387, %v2380
  %v2521 = vpack.c.b16 %v2388, %v2381
  %v2522 = vpack.c.b16 %v2396, %v2389
  %v2523 = vpack.c.b16 %v2397, %v2390
  %v2524 = vpack.c.b16 %v2398, %v2391
  %v2525 = vpack.c.b16 %v2399, %v2392
  %v2526 = vpack.c.b16 %v2400, %v2393
  %v2527 = vpack.c.b16 %v2401, %v2394
  %v2528 = vpack.c.b16 %v2402, %v2395
  %v2529 = vpack.c.b16 %v2410, %v2403
  %v2530 = vpack.c.b16 %v2411, %v2404
  %v2531 = vpack.c.b16 %v2412, %v2405
  %v2532 = vpack.c.b16 %v2413, %v2406
  %v2533 = vpack.c.b16 %v2414, %v2407
  %v2534 = vpack.c.b16 %v2415, %v2408
  %v2535 = vpack.c.b16 %v2416, %v2409
  %v2536 = vpack.c.b16 %v2424, %v2417
  %v2537 = vpack.c.b16 %v2425, %v2418
  %v2538 = vpack.c.b16 %v2426, %v2419
  %v2539 = vpack.c.b16 %v2427, %v2420
  %v2540 = vpack.c.b16 %v2428, %v2421
  %v2541 = vpack.c.b16 %v2429, %v2422
  %v2542 = vpack.c.b16 %v2430, %v2423
  %2655 = vmatprep.subr.bf16.mxu0 %v2481
  %2656 = vmatpush1.bf16.msra.mxu0 %v2480
  %2657 = vmatprep.subr.bf16.mxu0 %v2474
  %2658 = vmatpush1.bf16.msra.mxu0 %v2473
  %2659 = vmatprep.subr.bf16.mxu0 %v2467
  %2660 = vmatpush1.bf16.msra.mxu0 %v2466
  %2661 = vmatprep.subr.bf16.mxu0 %v2460
  %2662 = vmatpush1.bf16.msra.mxu0 %v2459
  %2663 = vmatprep.subr.bf16.mxu0 %v2453
  %2664 = vmatpush1.bf16.msra.mxu0 %v2452
  %2665 = vmatprep.subr.bf16.mxu0 %v2446
  %2666 = vmatpush1.bf16.msra.mxu0 %v2445
  %2667 = vmatprep.subr.bf16.mxu0 %v2439
  %2668 = vmatpush1.bf16.msra.mxu0 %v2438
  %2669 = vmatprep.subr.bf16.mxu0 %v2432
  %2670 = vmatpush1.bf16.msra.mxu0 %v2431
  %2671 = vmatprep.subr.bf16.mxu0 %v2537
  %2672 = vmatpush2.bf16.msra.mxu0 %v2536
  %2673 = vmatprep.subr.bf16.mxu0 %v2530
  %2674 = vmatpush2.bf16.msra.mxu0 %v2529
  %2675 = vmatprep.subr.bf16.mxu0 %v2523
  %2676 = vmatpush2.bf16.msra.mxu0 %v2522
  %2677 = vmatprep.subr.bf16.mxu0 %v2516
  %2678 = vmatpush2.bf16.msra.mxu0 %v2515
  %2679 = vmatprep.subr.bf16.mxu0 %v2509
  %2680 = vmatpush2.bf16.msra.mxu0 %v2508
  %2681 = vmatprep.subr.bf16.mxu0 %v2502
  %2682 = vmatpush2.bf16.msra.mxu0 %v2501
  %2683 = vmatprep.subr.bf16.mxu0 %v2495
  %2684 = vmatpush2.bf16.msra.mxu0 %v2494
  %2685 = vmatprep.subr.bf16.mxu0 %v2488
  %2686 = vmatpush2.bf16.msra.mxu0 %v2487
  %2687 = vmatprep.mubr.bf16.mxu0 %v1913
  %2688 = vmatmul.mubr.bf16.gmra.mxu0 %v1912
  %v2689 = vpop.f32.mrf.mxu0
  %v2690 = vadd.f32 %v2047, %v2689
  %v2691 = vpop.f32.mrf.mxu0
  %v2692 = vadd.f32 %v2051, %v2691
  %v2693 = vpop.f32.mrf.mxu0
  %v2694 = vadd.f32 %v2047, %v2693
  %v2695 = vpop.f32.mrf.mxu0
  %v2696 = vadd.f32 %v2051, %v2695
  %2697 = vdwg.mxu0
  %2698 = vmatprep.subr.bf16.mxu0 %v2483
  %2699 = vmatpush1.bf16.msra.mxu0 %v2482
  %2700 = vmatprep.subr.bf16.mxu0 %v2476
  %2701 = vmatpush1.bf16.msra.mxu0 %v2475
  %2702 = vmatprep.subr.bf16.mxu0 %v2469
  %2703 = vmatpush1.bf16.msra.mxu0 %v2468
  %2704 = vmatprep.subr.bf16.mxu0 %v2462
  %2705 = vmatpush1.bf16.msra.mxu0 %v2461
  %2706 = vmatprep.subr.bf16.mxu0 %v2455
  %2707 = vmatpush1.bf16.msra.mxu0 %v2454
  %2708 = vmatprep.subr.bf16.mxu0 %v2448
  %2709 = vmatpush1.bf16.msra.mxu0 %v2447
  %2710 = vmatprep.subr.bf16.mxu0 %v2441
  %2711 = vmatpush1.bf16.msra.mxu0 %v2440
  %2712 = vmatprep.subr.bf16.mxu0 %v2434
  %2713 = vmatpush1.bf16.msra.mxu0 %v2433
  %2714 = vmatprep.subr.bf16.mxu0 %v2539
  %2715 = vmatpush2.bf16.msra.mxu0 %v2538
  %2716 = vmatprep.subr.bf16.mxu0 %v2532
  %2717 = vmatpush2.bf16.msra.mxu0 %v2531
  %2718 = vmatprep.subr.bf16.mxu0 %v2525
  %2719 = vmatpush2.bf16.msra.mxu0 %v2524
  %2720 = vmatprep.subr.bf16.mxu0 %v2518
  %2721 = vmatpush2.bf16.msra.mxu0 %v2517
  %2722 = vmatprep.subr.bf16.mxu0 %v2511
  %2723 = vmatpush2.bf16.msra.mxu0 %v2510
  %2724 = vmatprep.subr.bf16.mxu0 %v2504
  %2725 = vmatpush2.bf16.msra.mxu0 %v2503
  %2726 = vmatprep.subr.bf16.mxu0 %v2497
  %2727 = vmatpush2.bf16.msra.mxu0 %v2496
  %2728 = vmatprep.subr.bf16.mxu0 %v2490
  %2729 = vmatpush2.bf16.msra.mxu0 %v2489
  %2730 = vmatprep.mubr.bf16.mxu0 %v1913
  %2731 = vmatmul.mubr.bf16.gmra.mxu0 %v1912
  %v2732 = vpop.f32.mrf.mxu0
  %v2733 = vadd.f32 %v2055, %v2732
  %v2734 = vpop.f32.mrf.mxu0
  %v2735 = vadd.f32 %v2059, %v2734
  %v2736 = vpop.f32.mrf.mxu0
  %v2737 = vadd.f32 %v2055, %v2736
  %v2738 = vpop.f32.mrf.mxu0
  %v2739 = vadd.f32 %v2059, %v2738
  %2740 = vdwg.mxu0
  %2741 = vmatprep.subr.bf16.mxu0 %v2485
  %2742 = vmatpush1.bf16.msra.mxu0 %v2484
  %2743 = vmatprep.subr.bf16.mxu0 %v2478
  %2744 = vmatpush1.bf16.msra.mxu0 %v2477
  %2745 = vmatprep.subr.bf16.mxu0 %v2471
  %2746 = vmatpush1.bf16.msra.mxu0 %v2470
  %2747 = vmatprep.subr.bf16.mxu0 %v2464
  %2748 = vmatpush1.bf16.msra.mxu0 %v2463
  %2749 = vmatprep.subr.bf16.mxu0 %v2457
  %2750 = vmatpush1.bf16.msra.mxu0 %v2456
  %2751 = vmatprep.subr.bf16.mxu0 %v2450
  %2752 = vmatpush1.bf16.msra.mxu0 %v2449
  %2753 = vmatprep.subr.bf16.mxu0 %v2443
  %2754 = vmatpush1.bf16.msra.mxu0 %v2442
  %2755 = vmatprep.subr.bf16.mxu0 %v2436
  %2756 = vmatpush1.bf16.msra.mxu0 %v2435
  %2757 = vmatprep.subr.bf16.mxu0 %v2541
  %2758 = vmatpush2.bf16.msra.mxu0 %v2540
  %2759 = vmatprep.subr.bf16.mxu0 %v2534
  %2760 = vmatpush2.bf16.msra.mxu0 %v2533
  %2761 = vmatprep.subr.bf16.mxu0 %v2527
  %2762 = vmatpush2.bf16.msra.mxu0 %v2526
  %2763 = vmatprep.subr.bf16.mxu0 %v2520
  %2764 = vmatpush2.bf16.msra.mxu0 %v2519
  %2765 = vmatprep.subr.bf16.mxu0 %v2513
  %2766 = vmatpush2.bf16.msra.mxu0 %v2512
  %2767 = vmatprep.subr.bf16.mxu0 %v2506
  %2768 = vmatpush2.bf16.msra.mxu0 %v2505
  %2769 = vmatprep.subr.bf16.mxu0 %v2499
  %2770 = vmatpush2.bf16.msra.mxu0 %v2498
  %2771 = vmatprep.subr.bf16.mxu0 %v2492
  %2772 = vmatpush2.bf16.msra.mxu0 %v2491
  %2773 = vmatprep.mubr.bf16.mxu0 %v1913
  %2774 = vmatmul.mubr.bf16.gmra.mxu0 %v1912
  %v2775 = vpop.f32.mrf.mxu0
  %v2776 = vadd.f32 %v2063, %v2775
  %v2777 = vpop.f32.mrf.mxu0
  %v2778 = vadd.f32 %v2067, %v2777
  %v2779 = vpop.f32.mrf.mxu0
  %v2780 = vadd.f32 %v2063, %v2779
  %v2781 = vpop.f32.mrf.mxu0
  %v2782 = vadd.f32 %v2067, %v2781
  %2783 = vdwg.mxu0
  %2784 = vmatprep.subr.bf16.mxu0 0
  %2785 = vmatpush1.bf16.msra.mxu0 %v2486
  %2786 = vmatprep.subr.bf16.mxu0 0
  %2787 = vmatpush1.bf16.msra.mxu0 %v2479
  %2788 = vmatprep.subr.bf16.mxu0 0
  %2789 = vmatpush1.bf16.msra.mxu0 %v2472
  %2790 = vmatprep.subr.bf16.mxu0 0
  %2791 = vmatpush1.bf16.msra.mxu0 %v2465
  %2792 = vmatprep.subr.bf16.mxu0 0
  %2793 = vmatpush1.bf16.msra.mxu0 %v2458
  %2794 = vmatprep.subr.bf16.mxu0 0
  %2795 = vmatpush1.bf16.msra.mxu0 %v2451
  %2796 = vmatprep.subr.bf16.mxu0 0
  %2797 = vmatpush1.bf16.msra.mxu0 %v2444
  %2798 = vmatprep.subr.bf16.mxu0 0
  %2799 = vmatpush1.bf16.msra.mxu0 %v2437
  %2800 = vmatprep.subr.bf16.mxu0 0
  %2801 = vmatpush2.bf16.msra.mxu0 %v2542
  %2802 = vmatprep.subr.bf16.mxu0 0
  %2803 = vmatpush2.bf16.msra.mxu0 %v2535
  %2804 = vmatprep.subr.bf16.mxu0 0
  %2805 = vmatpush2.bf16.msra.mxu0 %v2528
  %2806 = vmatprep.subr.bf16.mxu0 0
  %2807 = vmatpush2.bf16.msra.mxu0 %v2521
  %2808 = vmatprep.subr.bf16.mxu0 0
  %2809 = vmatpush2.bf16.msra.mxu0 %v2514
  %2810 = vmatprep.subr.bf16.mxu0 0
  %2811 = vmatpush2.bf16.msra.mxu0 %v2507
  %2812 = vmatprep.subr.bf16.mxu0 0
  %2813 = vmatpush2.bf16.msra.mxu0 %v2500
  %2814 = vmatprep.subr.bf16.mxu0 0
  %2815 = vmatpush2.bf16.msra.mxu0 %v2493
  %2816 = vmatprep.mubr.bf16.mxu0 %v1913
  %2817 = vmatmul.mubr.bf16.gmra.mxu0 %v1912
  %v2818 = vpop.f32.mrf.mxu0
  %v2819 = vadd.f32 %v2071, %v2818
  %v2820 = vpop.f32.mrf.mxu0
  %v2821 = vpop.f32.mrf.mxu0
  %v2822 = vadd.f32 %v2071, %v2821
  %v2823 = vpop.f32.mrf.mxu0
  %2824 = vdwg.mxu0
  %v2825 = vsub.f32 0.0, %v2690
  %v2826 = vsub.f32 0.0, %v2692
  %v2827 = vsub.f32 0.0, %v2733
  %v2828 = vsub.f32 0.0, %v2735
  %v2829 = vsub.f32 0.0, %v2776
  %v2830 = vsub.f32 0.0, %v2778
  %v2831 = vsub.f32 0.0, %v2819
  %v2832 = vsub.f32 0.0, %v2694
  %v2833 = vsub.f32 0.0, %v2696
  %v2834 = vsub.f32 0.0, %v2737
  %v2835 = vsub.f32 0.0, %v2739
  %v2836 = vsub.f32 0.0, %v2780
  %v2837 = vsub.f32 0.0, %v2782
  %v2838 = vsub.f32 0.0, %v2822
  %v2839 = vmul.f32 %v2825, 1.442695
  %v2840 = vpow.pop %v2839
  %v2841 = vmul.f32 %v2826, 1.442695
  %v2842 = vpow.pop %v2841
  %v2843 = vmul.f32 %v2827, 1.442695
  %v2844 = vpow.pop %v2843
  %v2845 = vmul.f32 %v2828, 1.442695
  %v2846 = vpow.pop %v2845
  %v2847 = vmul.f32 %v2829, 1.442695
  %v2848 = vpow.pop %v2847
  %v2849 = vmul.f32 %v2830, 1.442695
  %v2850 = vpow.pop %v2849
  %v2851 = vmul.f32 %v2831, 1.442695
  %v2852 = vpow.pop %v2851
  %v2853 = vmul.f32 %v2832, 1.442695
  %v2854 = vpow.pop %v2853
  %v2855 = vmul.f32 %v2833, 1.442695
  %v2856 = vpow.pop %v2855
  %v2857 = vmul.f32 %v2834, 1.442695
  %v2858 = vpow.pop %v2857
  %v2859 = vmul.f32 %v2835, 1.442695
  %v2860 = vpow.pop %v2859
  %v2861 = vmul.f32 %v2836, 1.442695
  %v2862 = vpow.pop %v2861
  %v2863 = vmul.f32 %v2837, 1.442695
  %v2864 = vpow.pop %v2863
  %v2865 = vmul.f32 %v2838, 1.442695
  %v2866 = vpow.pop %v2865
  %v2867 = vadd.f32 %v2840, 1.0
  %v2868 = vadd.f32 %v2842, 1.0
  %v2869 = vadd.f32 %v2844, 1.0
  %v2870 = vadd.f32 %v2846, 1.0
  %v2871 = vadd.f32 %v2848, 1.0
  %v2872 = vadd.f32 %v2850, 1.0
  %v2873 = vadd.f32 %v2852, 1.0
  %v2874 = vadd.f32 %v2854, 1.0
  %v2875 = vadd.f32 %v2856, 1.0
  %v2876 = vadd.f32 %v2858, 1.0
  %v2877 = vadd.f32 %v2860, 1.0
  %v2878 = vadd.f32 %v2862, 1.0
  %v2879 = vadd.f32 %v2864, 1.0
  %v2880 = vadd.f32 %v2866, 1.0
  %v2881 = vrcp.pop %v2867
  %v2882 = vrcp.pop %v2868
  %v2883 = vrcp.pop %v2869
  %v2884 = vrcp.pop %v2870
  %v2885 = vrcp.pop %v2871
  %v2886 = vrcp.pop %v2872
  %v2887 = vrcp.pop %v2873
  %v2888 = vrcp.pop %v2874
  %v2889 = vrcp.pop %v2875
  %v2890 = vrcp.pop %v2876
  %v2891 = vrcp.pop %v2877
  %v2892 = vrcp.pop %v2878
  %v2893 = vrcp.pop %v2879
  %v2894 = vrcp.pop %v2880
  %v2895 = vpack.c.bf16 %v2888, %v2881
  %v2896 = vpack.c.bf16 %v2889, %v2882
  %v2897 = vpack.c.bf16 %v2890, %v2883
  %v2898 = vpack.c.bf16 %v2891, %v2884
  %v2899 = vpack.c.bf16 %v2892, %v2885
  %v2900 = vpack.c.bf16 %v2893, %v2886
  %v2901 = vpack.c.bf16 %v2894, %v2887
  %v2909 = vunpack.c.l.b16 %v2895
  %v2910 = vunpack.c.l.b16 %v2896
  %v2911 = vunpack.c.l.b16 %v2897
  %v2912 = vunpack.c.l.b16 %v2898
  %v2913 = vunpack.c.l.b16 %v2899
  %v2914 = vunpack.c.l.b16 %v2900
  %v2915 = vunpack.c.l.b16 %v2901
  %v2916 = vunpack.c.h.b16 %v2895
  %v2917 = vunpack.c.h.b16 %v2896
  %v2918 = vunpack.c.h.b16 %v2897
  %v2919 = vunpack.c.h.b16 %v2898
  %v2920 = vunpack.c.h.b16 %v2899
  %v2921 = vunpack.c.h.b16 %v2900
  %v2922 = vunpack.c.h.b16 %v2901
  %v2923 = vpack.c.b16 %v2910, %v2909
  %v2924 = vpack.c.b16 %v2912, %v2911
  %v2925 = vpack.c.b16 %v2914, %v2913
  %v2926 = vpack.c.b16 %v2915, %v2915
  %v2927 = vpack.c.b16 %v2917, %v2916
  %v2928 = vpack.c.b16 %v2919, %v2918
  %v2929 = vpack.c.b16 %v2921, %v2920
  %v2930 = vpack.c.b16 %v2922, %v2922
  %2939 = vst [vmem:[%s16] sm:$0xff] %v2923
  %2940 = vst [vmem:[%s16 + $0x8] sm:$0xff] %v2924
  %2941 = vst [vmem:[%s16 + $0x10] sm:$0xff] %v2925
  %vm2942 = vcmask 125952
  %2943 = vst.msk [vmem:[%s16 + $0x18] sm:$0xf] %vm2942, %v2926
  %2944 = vst [vmem:[%s16 + $0x1c] sm:$0xff] %v2927
  %2945 = vst [vmem:[%s16 + $0x24] sm:$0xff] %v2928
  %2946 = vst [vmem:[%s16 + $0x2c] sm:$0xff] %v2929
  %2947 = vst.msk [vmem:[%s16 + $0x34] sm:$0xf] %vm2942, %v2930
  // Predicated region
  $region66: #{vae_forward.1} parent=0 // pred_check
    _
  $region67: #{vae_forward.1} parent=0 // pred_check_branch
    %2949 = sbr.rel (0) target = $region69
  $region68: #{vae_forward.1} parent=0 // pred_region
    _
  $region69: #{vae_forward.1} parent=0 // pred_fallthru
    _
  // Predicated region
  $region70: #{vae_forward.1} parent=0 // pred_check
    _
  $region71: #{vae_forward.1} parent=0 // pred_check_branch
    %2951 = sbr.rel (0) target = $region73
  $region72: #{vae_forward.1} parent=0 // pred_region
    _
  $region73: #{vae_forward.1} parent=0 // pred_fallthru
    _
  // Predicated region
  $region74: #{vae_forward.1} parent=0 // pred_check
    _
  $region75: #{vae_forward.1} parent=0 // pred_check_branch
    %2953 = sbr.rel (0) target = $region77
  $region76: #{vae_forward.1} parent=0 // pred_region
    _
  $region77: #{vae_forward.1} parent=0 // pred_fallthru
    _
  // Predicated region
  $region78: #{vae_forward.1} parent=0 // pred_check
    _
  $region79: #{vae_forward.1} parent=0 // pred_check_branch
    %2955 = sbr.rel (0) target = $region81
  $region80: #{vae_forward.1} parent=0 // pred_region
    _
  $region81: #{vae_forward.1} parent=0 // pred_fallthru
    _
  // Predicated region
  $region82: #{vae_forward.1} parent=0 // pred_check
    _
  $region83: #{vae_forward.1} parent=0 // pred_check_branch
    %2957 = sbr.rel (0) target = $region85
  $region84: #{vae_forward.1} parent=0 // pred_region
    _
  $region85: #{vae_forward.1} parent=0 // pred_fallthru
    _
  // Predicated region
  $region86: #{vae_forward.1} parent=0 // pred_check
    _
  $region87: #{vae_forward.1} parent=0 // pred_check_branch
    %2959 = sbr.rel (0) target = $region89
  $region88: #{vae_forward.1} parent=0 // pred_region
    _
  $region89: #{vae_forward.1} parent=0 // pred_fallthru
    _

</llo_original>
